<compile_context>
chip_gen: v5e
topology: v5e:2x2
jax: 0.10.0
libtpu: 0.0.40
codegen_flags: <defaults>
</compile_context>

<pallas_src>
import functools

import jax
import jax.numpy as jnp
from jax.experimental import pallas as pl
from jax.experimental.pallas import tpu as pltpu


def _make_conv_kernel(*, N, C, O, KH, KW, OH, OW, sh, sw, dh, dw):
    """Builds the fused-im2col conv kernel body (fully unrolled VPU FMAs)."""

    def kernel(w_ref, x_ref, o_ref):
        # w_ref: SMEM [O*C*KH*KW] f32, flattened in (o, c, kh, kw) order.
        # x_ref: VMEM [sh, sw, C, N, Hq, Wq] f32 (parity-split padded input).
        # o_ref: VMEM [O, N, OH, OW] f32.
        accs = [jnp.zeros((N, OH, OW), jnp.float32) for _ in range(O)]
        for c in range(C):
            for kh in range(KH):
                hp, a = (kh * dh) % sh, (kh * dh) // sh
                for kw in range(KW):
                    wp, b = (kw * dw) % sw, (kw * dw) // sw
                    # Contiguous tap window of one parity plane: [N, OH, OW].
                    tap = x_ref[hp, wp, c, :, a:a + OH, b:b + OW]
                    for o in range(O):
                        w = w_ref[((o * C + c) * KH + kh) * KW + kw]
                        accs[o] = accs[o] + w * tap
        for o in range(O):
            o_ref[o] = accs[o]          # f32 store, no redundant astype

    return kernel


@functools.partial(jax.jit, static_argnames=("stride", "padding", "dilation"))
def conv2d_pallas(x_nchw, w_oihw, *, stride=(2, 2), padding=(3, 3),
                  dilation=(3, 3)):
    """conv2d, groups=1, no bias, arbitrary stride/padding/dilation."""
    N, C, H, W = x_nchw.shape
    O, Cw, KH, KW = w_oihw.shape
    assert C == Cw
    sh, sw = stride
    ph, pw = padding
    dh, dw = dilation
    OH = (H + 2 * ph - dh * (KH - 1) - 1) // sh + 1
    OW = (W + 2 * pw - dw * (KW - 1) - 1) // sw + 1

    # ---- zero-FLOP, size-preserving layout plumbing (no 9x patches) ----
    # Pad so the padded extents are multiples of the stride and cover every
    # parity-plane tap window.
    Hq = (KH - 1) * dh // sh + OH
    Wq = (KW - 1) * dw // sw + OW
    Hp = max(sh * Hq, H + 2 * ph)
    Hp += (-Hp) % sh
    Wp = max(sw * Wq, W + 2 * pw)
    Wp += (-Wp) % sw
    Hq, Wq = Hp // sh, Wp // sw

    xp = jnp.pad(x_nchw.astype(jnp.float32),
                 ((0, 0), (0, 0), (ph, Hp - H - ph), (pw, Wp - W - pw)))
    # Stride-parity space-to-depth: [N, C, Hp, Wp] -> [sh, sw, C, N, Hq, Wq].
    # Same number of bytes as xp; just a rearrangement (tap windows become
    # contiguous so the kernel never needs lane-strided loads).
    xs = xp.reshape(N, C, Hq, sh, Wq, sw).transpose(3, 5, 1, 0, 2, 4)

    # Weights flattened for cheap scalar reads from SMEM.
    w_flat = w_oihw.astype(jnp.float32).reshape(O * C * KH * KW)

    kernel = _make_conv_kernel(N=N, C=C, O=O, KH=KH, KW=KW, OH=OH, OW=OW,
                               sh=sh, sw=sw, dh=dh, dw=dw)

    flops = 2 * N * OH * OW * O * C * KH * KW
    bytes_accessed = 4 * (xs.size + w_flat.size + O * N * OH * OW)

    out = pl.pallas_call(
        kernel,
        out_shape=jax.ShapeDtypeStruct((O, N, OH, OW), jnp.float32),
        in_specs=[
            pl.BlockSpec(memory_space=pltpu.MemorySpace.SMEM),   # weights
            pl.BlockSpec(memory_space=pltpu.MemorySpace.VMEM),   # parity input
        ],
        out_specs=pl.BlockSpec(memory_space=pltpu.MemorySpace.VMEM),
        cost_estimate=pl.CostEstimate(flops=flops, transcendentals=0,
                                      bytes_accessed=bytes_accessed),
    )(w_flat, xs)

    # [O, N, OH, OW] -> NCHW (tiny wrapper-side transpose).
    # Note: final astype matches the caller's dtype (PyTorch conv semantics);
    # bf16 callers would get a downcast of the f32 accumulation here.
    return jnp.transpose(out, (1, 0, 2, 3)).astype(x_nchw.dtype)


if __name__ == "__main__":
    key = jax.random.PRNGKey(0)
    kx, kw = jax.random.split(key)

    # Small shapes consistent with the module: in_channels=2, out_channels=10,
    # kernel 3x3, padding=3, stride=2, dilation=3.
    N, C, H, W = 2, 2, 16, 16
    O, KH, KW = 10, 3, 3

    x = jax.random.normal(kx, (N, C, H, W), dtype=jnp.float32)
    w = jax.random.normal(kw, (O, C, KH, KW), dtype=jnp.float32)

    out = jax.block_until_ready(conv2d_pallas(x, w))

    # Reference: same semantics as aten.convolution with these parameters.
    ref = jax.lax.conv_general_dilated(
        x, w, window_strides=(2, 2), padding=((3, 3), (3, 3)),
        rhs_dilation=(3, 3),
        dimension_numbers=("NCHW", "OIHW", "NCHW"))

    assert out.shape == ref.shape == (N, O, 8, 8), (out.shape, ref.shape)
    assert jnp.allclose(out, ref, atol=1e-4, rtol=1e-4)
    print("KERNEL_OK")
</pallas_src>

<mosaic_0001>
module attributes {stable_mosaic.version = 11 : i64} {
  func.func @kernel(%arg0: memref<180xf32, #tpu.memory_space<smem>>, %arg1: memref<2x2x2x2x11x11xf32, #tpu.memory_space<vmem>>, %arg2: memref<10x2x8x8xf32, #tpu.memory_space<vmem>>) attributes {dimension_semantics = [], scalar_prefetch = 0 : i64, scratch_operands = 0 : i64, tpu.core_type = #tpu.core_type<tc>} {
    %cst = arith.constant 0.000000e+00 : f32
    %0 = vector.broadcast %cst : f32 to vector<2x8x8xf32>
    %cst_0 = arith.constant 0.000000e+00 : f32
    %1 = vector.broadcast %cst_0 : f32 to vector<2x8x8xf32>
    %cst_1 = arith.constant 0.000000e+00 : f32
    %2 = vector.broadcast %cst_1 : f32 to vector<2x8x8xf32>
    %cst_2 = arith.constant 0.000000e+00 : f32
    %3 = vector.broadcast %cst_2 : f32 to vector<2x8x8xf32>
    %cst_3 = arith.constant 0.000000e+00 : f32
    %4 = vector.broadcast %cst_3 : f32 to vector<2x8x8xf32>
    %cst_4 = arith.constant 0.000000e+00 : f32
    %5 = vector.broadcast %cst_4 : f32 to vector<2x8x8xf32>
    %cst_5 = arith.constant 0.000000e+00 : f32
    %6 = vector.broadcast %cst_5 : f32 to vector<2x8x8xf32>
    %cst_6 = arith.constant 0.000000e+00 : f32
    %7 = vector.broadcast %cst_6 : f32 to vector<2x8x8xf32>
    %cst_7 = arith.constant 0.000000e+00 : f32
    %8 = vector.broadcast %cst_7 : f32 to vector<2x8x8xf32>
    %cst_8 = arith.constant 0.000000e+00 : f32
    %9 = vector.broadcast %cst_8 : f32 to vector<2x8x8xf32>
    %c0 = arith.constant 0 : index
    %c0_9 = arith.constant 0 : index
    %c0_10 = arith.constant 0 : index
    %c0_11 = arith.constant 0 : index
    %c0_12 = arith.constant 0 : index
    %c0_13 = arith.constant 0 : index
    %10 = vector.load %arg1[%c0, %c0_9, %c0_10, %c0_11, %c0_12, %c0_13] : memref<2x2x2x2x11x11xf32, #tpu.memory_space<vmem>>, vector<1x1x1x2x8x8xf32>
    %11 = vector.shape_cast %10 : vector<1x1x1x2x8x8xf32> to vector<2x8x8xf32>
    %c0_14 = arith.constant 0 : index
    %12 = memref.load %arg0[%c0_14] : memref<180xf32, #tpu.memory_space<smem>>
    %13 = vector.broadcast %12 : f32 to vector<2x8x8xf32>
    %14 = arith.mulf %13, %11 : vector<2x8x8xf32>
    %15 = arith.addf %0, %14 : vector<2x8x8xf32>
    %c18 = arith.constant 18 : index
    %16 = memref.load %arg0[%c18] : memref<180xf32, #tpu.memory_space<smem>>
    %17 = vector.broadcast %16 : f32 to vector<2x8x8xf32>
    %18 = arith.mulf %17, %11 : vector<2x8x8xf32>
    %19 = arith.addf %1, %18 : vector<2x8x8xf32>
    %c36 = arith.constant 36 : index
    %20 = memref.load %arg0[%c36] : memref<180xf32, #tpu.memory_space<smem>>
    %21 = vector.broadcast %20 : f32 to vector<2x8x8xf32>
    %22 = arith.mulf %21, %11 : vector<2x8x8xf32>
    %23 = arith.addf %2, %22 : vector<2x8x8xf32>
    %c54 = arith.constant 54 : index
    %24 = memref.load %arg0[%c54] : memref<180xf32, #tpu.memory_space<smem>>
    %25 = vector.broadcast %24 : f32 to vector<2x8x8xf32>
    %26 = arith.mulf %25, %11 : vector<2x8x8xf32>
    %27 = arith.addf %3, %26 : vector<2x8x8xf32>
    %c72 = arith.constant 72 : index
    %28 = memref.load %arg0[%c72] : memref<180xf32, #tpu.memory_space<smem>>
    %29 = vector.broadcast %28 : f32 to vector<2x8x8xf32>
    %30 = arith.mulf %29, %11 : vector<2x8x8xf32>
    %31 = arith.addf %4, %30 : vector<2x8x8xf32>
    %c90 = arith.constant 90 : index
    %32 = memref.load %arg0[%c90] : memref<180xf32, #tpu.memory_space<smem>>
    %33 = vector.broadcast %32 : f32 to vector<2x8x8xf32>
    %34 = arith.mulf %33, %11 : vector<2x8x8xf32>
    %35 = arith.addf %5, %34 : vector<2x8x8xf32>
    %c108 = arith.constant 108 : index
    %36 = memref.load %arg0[%c108] : memref<180xf32, #tpu.memory_space<smem>>
    %37 = vector.broadcast %36 : f32 to vector<2x8x8xf32>
    %38 = arith.mulf %37, %11 : vector<2x8x8xf32>
    %39 = arith.addf %6, %38 : vector<2x8x8xf32>
    %c126 = arith.constant 126 : index
    %40 = memref.load %arg0[%c126] : memref<180xf32, #tpu.memory_space<smem>>
    %41 = vector.broadcast %40 : f32 to vector<2x8x8xf32>
    %42 = arith.mulf %41, %11 : vector<2x8x8xf32>
    %43 = arith.addf %7, %42 : vector<2x8x8xf32>
    %c144 = arith.constant 144 : index
    %44 = memref.load %arg0[%c144] : memref<180xf32, #tpu.memory_space<smem>>
    %45 = vector.broadcast %44 : f32 to vector<2x8x8xf32>
    %46 = arith.mulf %45, %11 : vector<2x8x8xf32>
    %47 = arith.addf %8, %46 : vector<2x8x8xf32>
    %c162 = arith.constant 162 : index
    %48 = memref.load %arg0[%c162] : memref<180xf32, #tpu.memory_space<smem>>
    %49 = vector.broadcast %48 : f32 to vector<2x8x8xf32>
    %50 = arith.mulf %49, %11 : vector<2x8x8xf32>
    %51 = arith.addf %9, %50 : vector<2x8x8xf32>
    %c0_15 = arith.constant 0 : index
    %c1 = arith.constant 1 : index
    %c0_16 = arith.constant 0 : index
    %c0_17 = arith.constant 0 : index
    %c0_18 = arith.constant 0 : index
    %c1_19 = arith.constant 1 : index
    %52 = vector.load %arg1[%c0_15, %c1, %c0_16, %c0_17, %c0_18, %c1_19] : memref<2x2x2x2x11x11xf32, #tpu.memory_space<vmem>>, vector<1x1x1x2x8x8xf32>
    %53 = vector.shape_cast %52 : vector<1x1x1x2x8x8xf32> to vector<2x8x8xf32>
    %c1_20 = arith.constant 1 : index
    %54 = memref.load %arg0[%c1_20] : memref<180xf32, #tpu.memory_space<smem>>
    %55 = vector.broadcast %54 : f32 to vector<2x8x8xf32>
    %56 = arith.mulf %55, %53 : vector<2x8x8xf32>
    %57 = arith.addf %15, %56 : vector<2x8x8xf32>
    %c19 = arith.constant 19 : index
    %58 = memref.load %arg0[%c19] : memref<180xf32, #tpu.memory_space<smem>>
    %59 = vector.broadcast %58 : f32 to vector<2x8x8xf32>
    %60 = arith.mulf %59, %53 : vector<2x8x8xf32>
    %61 = arith.addf %19, %60 : vector<2x8x8xf32>
    %c37 = arith.constant 37 : index
    %62 = memref.load %arg0[%c37] : memref<180xf32, #tpu.memory_space<smem>>
    %63 = vector.broadcast %62 : f32 to vector<2x8x8xf32>
    %64 = arith.mulf %63, %53 : vector<2x8x8xf32>
    %65 = arith.addf %23, %64 : vector<2x8x8xf32>
    %c55 = arith.constant 55 : index
    %66 = memref.load %arg0[%c55] : memref<180xf32, #tpu.memory_space<smem>>
    %67 = vector.broadcast %66 : f32 to vector<2x8x8xf32>
    %68 = arith.mulf %67, %53 : vector<2x8x8xf32>
    %69 = arith.addf %27, %68 : vector<2x8x8xf32>
    %c73 = arith.constant 73 : index
    %70 = memref.load %arg0[%c73] : memref<180xf32, #tpu.memory_space<smem>>
    %71 = vector.broadcast %70 : f32 to vector<2x8x8xf32>
    %72 = arith.mulf %71, %53 : vector<2x8x8xf32>
    %73 = arith.addf %31, %72 : vector<2x8x8xf32>
    %c91 = arith.constant 91 : index
    %74 = memref.load %arg0[%c91] : memref<180xf32, #tpu.memory_space<smem>>
    %75 = vector.broadcast %74 : f32 to vector<2x8x8xf32>
    %76 = arith.mulf %75, %53 : vector<2x8x8xf32>
    %77 = arith.addf %35, %76 : vector<2x8x8xf32>
    %c109 = arith.constant 109 : index
    %78 = memref.load %arg0[%c109] : memref<180xf32, #tpu.memory_space<smem>>
    %79 = vector.broadcast %78 : f32 to vector<2x8x8xf32>
    %80 = arith.mulf %79, %53 : vector<2x8x8xf32>
    %81 = arith.addf %39, %80 : vector<2x8x8xf32>
    %c127 = arith.constant 127 : index
    %82 = memref.load %arg0[%c127] : memref<180xf32, #tpu.memory_space<smem>>
    %83 = vector.broadcast %82 : f32 to vector<2x8x8xf32>
    %84 = arith.mulf %83, %53 : vector<2x8x8xf32>
    %85 = arith.addf %43, %84 : vector<2x8x8xf32>
    %c145 = arith.constant 145 : index
    %86 = memref.load %arg0[%c145] : memref<180xf32, #tpu.memory_space<smem>>
    %87 = vector.broadcast %86 : f32 to vector<2x8x8xf32>
    %88 = arith.mulf %87, %53 : vector<2x8x8xf32>
    %89 = arith.addf %47, %88 : vector<2x8x8xf32>
    %c163 = arith.constant 163 : index
    %90 = memref.load %arg0[%c163] : memref<180xf32, #tpu.memory_space<smem>>
    %91 = vector.broadcast %90 : f32 to vector<2x8x8xf32>
    %92 = arith.mulf %91, %53 : vector<2x8x8xf32>
    %93 = arith.addf %51, %92 : vector<2x8x8xf32>
    %c0_21 = arith.constant 0 : index
    %c0_22 = arith.constant 0 : index
    %c0_23 = arith.constant 0 : index
    %c0_24 = arith.constant 0 : index
    %c0_25 = arith.constant 0 : index
    %c3 = arith.constant 3 : index
    %94 = vector.load %arg1[%c0_21, %c0_22, %c0_23, %c0_24, %c0_25, %c3] : memref<2x2x2x2x11x11xf32, #tpu.memory_space<vmem>>, vector<1x1x1x2x8x8xf32>
    %95 = vector.shape_cast %94 : vector<1x1x1x2x8x8xf32> to vector<2x8x8xf32>
    %c2 = arith.constant 2 : index
    %96 = memref.load %arg0[%c2] : memref<180xf32, #tpu.memory_space<smem>>
    %97 = vector.broadcast %96 : f32 to vector<2x8x8xf32>
    %98 = arith.mulf %97, %95 : vector<2x8x8xf32>
    %99 = arith.addf %57, %98 : vector<2x8x8xf32>
    %c20 = arith.constant 20 : index
    %100 = memref.load %arg0[%c20] : memref<180xf32, #tpu.memory_space<smem>>
    %101 = vector.broadcast %100 : f32 to vector<2x8x8xf32>
    %102 = arith.mulf %101, %95 : vector<2x8x8xf32>
    %103 = arith.addf %61, %102 : vector<2x8x8xf32>
    %c38 = arith.constant 38 : index
    %104 = memref.load %arg0[%c38] : memref<180xf32, #tpu.memory_space<smem>>
    %105 = vector.broadcast %104 : f32 to vector<2x8x8xf32>
    %106 = arith.mulf %105, %95 : vector<2x8x8xf32>
    %107 = arith.addf %65, %106 : vector<2x8x8xf32>
    %c56 = arith.constant 56 : index
    %108 = memref.load %arg0[%c56] : memref<180xf32, #tpu.memory_space<smem>>
    %109 = vector.broadcast %108 : f32 to vector<2x8x8xf32>
    %110 = arith.mulf %109, %95 : vector<2x8x8xf32>
    %111 = arith.addf %69, %110 : vector<2x8x8xf32>
    %c74 = arith.constant 74 : index
    %112 = memref.load %arg0[%c74] : memref<180xf32, #tpu.memory_space<smem>>
    %113 = vector.broadcast %112 : f32 to vector<2x8x8xf32>
    %114 = arith.mulf %113, %95 : vector<2x8x8xf32>
    %115 = arith.addf %73, %114 : vector<2x8x8xf32>
    %c92 = arith.constant 92 : index
    %116 = memref.load %arg0[%c92] : memref<180xf32, #tpu.memory_space<smem>>
    %117 = vector.broadcast %116 : f32 to vector<2x8x8xf32>
    %118 = arith.mulf %117, %95 : vector<2x8x8xf32>
    %119 = arith.addf %77, %118 : vector<2x8x8xf32>
    %c110 = arith.constant 110 : index
    %120 = memref.load %arg0[%c110] : memref<180xf32, #tpu.memory_space<smem>>
    %121 = vector.broadcast %120 : f32 to vector<2x8x8xf32>
    %122 = arith.mulf %121, %95 : vector<2x8x8xf32>
    %123 = arith.addf %81, %122 : vector<2x8x8xf32>
    %c128 = arith.constant 128 : index
    %124 = memref.load %arg0[%c128] : memref<180xf32, #tpu.memory_space<smem>>
    %125 = vector.broadcast %124 : f32 to vector<2x8x8xf32>
    %126 = arith.mulf %125, %95 : vector<2x8x8xf32>
    %127 = arith.addf %85, %126 : vector<2x8x8xf32>
    %c146 = arith.constant 146 : index
    %128 = memref.load %arg0[%c146] : memref<180xf32, #tpu.memory_space<smem>>
    %129 = vector.broadcast %128 : f32 to vector<2x8x8xf32>
    %130 = arith.mulf %129, %95 : vector<2x8x8xf32>
    %131 = arith.addf %89, %130 : vector<2x8x8xf32>
    %c164 = arith.constant 164 : index
    %132 = memref.load %arg0[%c164] : memref<180xf32, #tpu.memory_space<smem>>
    %133 = vector.broadcast %132 : f32 to vector<2x8x8xf32>
    %134 = arith.mulf %133, %95 : vector<2x8x8xf32>
    %135 = arith.addf %93, %134 : vector<2x8x8xf32>
    %c1_26 = arith.constant 1 : index
    %c0_27 = arith.constant 0 : index
    %c0_28 = arith.constant 0 : index
    %c0_29 = arith.constant 0 : index
    %c1_30 = arith.constant 1 : index
    %c0_31 = arith.constant 0 : index
    %136 = vector.load %arg1[%c1_26, %c0_27, %c0_28, %c0_29, %c1_30, %c0_31] : memref<2x2x2x2x11x11xf32, #tpu.memory_space<vmem>>, vector<1x1x1x2x8x8xf32>
    %137 = vector.shape_cast %136 : vector<1x1x1x2x8x8xf32> to vector<2x8x8xf32>
    %c3_32 = arith.constant 3 : index
    %138 = memref.load %arg0[%c3_32] : memref<180xf32, #tpu.memory_space<smem>>
    %139 = vector.broadcast %138 : f32 to vector<2x8x8xf32>
    %140 = arith.mulf %139, %137 : vector<2x8x8xf32>
    %141 = arith.addf %99, %140 : vector<2x8x8xf32>
    %c21 = arith.constant 21 : index
    %142 = memref.load %arg0[%c21] : memref<180xf32, #tpu.memory_space<smem>>
    %143 = vector.broadcast %142 : f32 to vector<2x8x8xf32>
    %144 = arith.mulf %143, %137 : vector<2x8x8xf32>
    %145 = arith.addf %103, %144 : vector<2x8x8xf32>
    %c39 = arith.constant 39 : index
    %146 = memref.load %arg0[%c39] : memref<180xf32, #tpu.memory_space<smem>>
    %147 = vector.broadcast %146 : f32 to vector<2x8x8xf32>
    %148 = arith.mulf %147, %137 : vector<2x8x8xf32>
    %149 = arith.addf %107, %148 : vector<2x8x8xf32>
    %c57 = arith.constant 57 : index
    %150 = memref.load %arg0[%c57] : memref<180xf32, #tpu.memory_space<smem>>
    %151 = vector.broadcast %150 : f32 to vector<2x8x8xf32>
    %152 = arith.mulf %151, %137 : vector<2x8x8xf32>
    %153 = arith.addf %111, %152 : vector<2x8x8xf32>
    %c75 = arith.constant 75 : index
    %154 = memref.load %arg0[%c75] : memref<180xf32, #tpu.memory_space<smem>>
    %155 = vector.broadcast %154 : f32 to vector<2x8x8xf32>
    %156 = arith.mulf %155, %137 : vector<2x8x8xf32>
    %157 = arith.addf %115, %156 : vector<2x8x8xf32>
    %c93 = arith.constant 93 : index
    %158 = memref.load %arg0[%c93] : memref<180xf32, #tpu.memory_space<smem>>
    %159 = vector.broadcast %158 : f32 to vector<2x8x8xf32>
    %160 = arith.mulf %159, %137 : vector<2x8x8xf32>
    %161 = arith.addf %119, %160 : vector<2x8x8xf32>
    %c111 = arith.constant 111 : index
    %162 = memref.load %arg0[%c111] : memref<180xf32, #tpu.memory_space<smem>>
    %163 = vector.broadcast %162 : f32 to vector<2x8x8xf32>
    %164 = arith.mulf %163, %137 : vector<2x8x8xf32>
    %165 = arith.addf %123, %164 : vector<2x8x8xf32>
    %c129 = arith.constant 129 : index
    %166 = memref.load %arg0[%c129] : memref<180xf32, #tpu.memory_space<smem>>
    %167 = vector.broadcast %166 : f32 to vector<2x8x8xf32>
    %168 = arith.mulf %167, %137 : vector<2x8x8xf32>
    %169 = arith.addf %127, %168 : vector<2x8x8xf32>
    %c147 = arith.constant 147 : index
    %170 = memref.load %arg0[%c147] : memref<180xf32, #tpu.memory_space<smem>>
    %171 = vector.broadcast %170 : f32 to vector<2x8x8xf32>
    %172 = arith.mulf %171, %137 : vector<2x8x8xf32>
    %173 = arith.addf %131, %172 : vector<2x8x8xf32>
    %c165 = arith.constant 165 : index
    %174 = memref.load %arg0[%c165] : memref<180xf32, #tpu.memory_space<smem>>
    %175 = vector.broadcast %174 : f32 to vector<2x8x8xf32>
    %176 = arith.mulf %175, %137 : vector<2x8x8xf32>
    %177 = arith.addf %135, %176 : vector<2x8x8xf32>
    %c1_33 = arith.constant 1 : index
    %c1_34 = arith.constant 1 : index
    %c0_35 = arith.constant 0 : index
    %c0_36 = arith.constant 0 : index
    %c1_37 = arith.constant 1 : index
    %c1_38 = arith.constant 1 : index
    %178 = vector.load %arg1[%c1_33, %c1_34, %c0_35, %c0_36, %c1_37, %c1_38] : memref<2x2x2x2x11x11xf32, #tpu.memory_space<vmem>>, vector<1x1x1x2x8x8xf32>
    %179 = vector.shape_cast %178 : vector<1x1x1x2x8x8xf32> to vector<2x8x8xf32>
    %c4 = arith.constant 4 : index
    %180 = memref.load %arg0[%c4] : memref<180xf32, #tpu.memory_space<smem>>
    %181 = vector.broadcast %180 : f32 to vector<2x8x8xf32>
    %182 = arith.mulf %181, %179 : vector<2x8x8xf32>
    %183 = arith.addf %141, %182 : vector<2x8x8xf32>
    %c22 = arith.constant 22 : index
    %184 = memref.load %arg0[%c22] : memref<180xf32, #tpu.memory_space<smem>>
    %185 = vector.broadcast %184 : f32 to vector<2x8x8xf32>
    %186 = arith.mulf %185, %179 : vector<2x8x8xf32>
    %187 = arith.addf %145, %186 : vector<2x8x8xf32>
    %c40 = arith.constant 40 : index
    %188 = memref.load %arg0[%c40] : memref<180xf32, #tpu.memory_space<smem>>
    %189 = vector.broadcast %188 : f32 to vector<2x8x8xf32>
    %190 = arith.mulf %189, %179 : vector<2x8x8xf32>
    %191 = arith.addf %149, %190 : vector<2x8x8xf32>
    %c58 = arith.constant 58 : index
    %192 = memref.load %arg0[%c58] : memref<180xf32, #tpu.memory_space<smem>>
    %193 = vector.broadcast %192 : f32 to vector<2x8x8xf32>
    %194 = arith.mulf %193, %179 : vector<2x8x8xf32>
    %195 = arith.addf %153, %194 : vector<2x8x8xf32>
    %c76 = arith.constant 76 : index
    %196 = memref.load %arg0[%c76] : memref<180xf32, #tpu.memory_space<smem>>
    %197 = vector.broadcast %196 : f32 to vector<2x8x8xf32>
    %198 = arith.mulf %197, %179 : vector<2x8x8xf32>
    %199 = arith.addf %157, %198 : vector<2x8x8xf32>
    %c94 = arith.constant 94 : index
    %200 = memref.load %arg0[%c94] : memref<180xf32, #tpu.memory_space<smem>>
    %201 = vector.broadcast %200 : f32 to vector<2x8x8xf32>
    %202 = arith.mulf %201, %179 : vector<2x8x8xf32>
    %203 = arith.addf %161, %202 : vector<2x8x8xf32>
    %c112 = arith.constant 112 : index
    %204 = memref.load %arg0[%c112] : memref<180xf32, #tpu.memory_space<smem>>
    %205 = vector.broadcast %204 : f32 to vector<2x8x8xf32>
    %206 = arith.mulf %205, %179 : vector<2x8x8xf32>
    %207 = arith.addf %165, %206 : vector<2x8x8xf32>
    %c130 = arith.constant 130 : index
    %208 = memref.load %arg0[%c130] : memref<180xf32, #tpu.memory_space<smem>>
    %209 = vector.broadcast %208 : f32 to vector<2x8x8xf32>
    %210 = arith.mulf %209, %179 : vector<2x8x8xf32>
    %211 = arith.addf %169, %210 : vector<2x8x8xf32>
    %c148 = arith.constant 148 : index
    %212 = memref.load %arg0[%c148] : memref<180xf32, #tpu.memory_space<smem>>
    %213 = vector.broadcast %212 : f32 to vector<2x8x8xf32>
    %214 = arith.mulf %213, %179 : vector<2x8x8xf32>
    %215 = arith.addf %173, %214 : vector<2x8x8xf32>
    %c166 = arith.constant 166 : index
    %216 = memref.load %arg0[%c166] : memref<180xf32, #tpu.memory_space<smem>>
    %217 = vector.broadcast %216 : f32 to vector<2x8x8xf32>
    %218 = arith.mulf %217, %179 : vector<2x8x8xf32>
    %219 = arith.addf %177, %218 : vector<2x8x8xf32>
    %c1_39 = arith.constant 1 : index
    %c0_40 = arith.constant 0 : index
    %c0_41 = arith.constant 0 : index
    %c0_42 = arith.constant 0 : index
    %c1_43 = arith.constant 1 : index
    %c3_44 = arith.constant 3 : index
    %220 = vector.load %arg1[%c1_39, %c0_40, %c0_41, %c0_42, %c1_43, %c3_44] : memref<2x2x2x2x11x11xf32, #tpu.memory_space<vmem>>, vector<1x1x1x2x8x8xf32>
    %221 = vector.shape_cast %220 : vector<1x1x1x2x8x8xf32> to vector<2x8x8xf32>
    %c5 = arith.constant 5 : index
    %222 = memref.load %arg0[%c5] : memref<180xf32, #tpu.memory_space<smem>>
    %223 = vector.broadcast %222 : f32 to vector<2x8x8xf32>
    %224 = arith.mulf %223, %221 : vector<2x8x8xf32>
    %225 = arith.addf %183, %224 : vector<2x8x8xf32>
    %c23 = arith.constant 23 : index
    %226 = memref.load %arg0[%c23] : memref<180xf32, #tpu.memory_space<smem>>
    %227 = vector.broadcast %226 : f32 to vector<2x8x8xf32>
    %228 = arith.mulf %227, %221 : vector<2x8x8xf32>
    %229 = arith.addf %187, %228 : vector<2x8x8xf32>
    %c41 = arith.constant 41 : index
    %230 = memref.load %arg0[%c41] : memref<180xf32, #tpu.memory_space<smem>>
    %231 = vector.broadcast %230 : f32 to vector<2x8x8xf32>
    %232 = arith.mulf %231, %221 : vector<2x8x8xf32>
    %233 = arith.addf %191, %232 : vector<2x8x8xf32>
    %c59 = arith.constant 59 : index
    %234 = memref.load %arg0[%c59] : memref<180xf32, #tpu.memory_space<smem>>
    %235 = vector.broadcast %234 : f32 to vector<2x8x8xf32>
    %236 = arith.mulf %235, %221 : vector<2x8x8xf32>
    %237 = arith.addf %195, %236 : vector<2x8x8xf32>
    %c77 = arith.constant 77 : index
    %238 = memref.load %arg0[%c77] : memref<180xf32, #tpu.memory_space<smem>>
    %239 = vector.broadcast %238 : f32 to vector<2x8x8xf32>
    %240 = arith.mulf %239, %221 : vector<2x8x8xf32>
    %241 = arith.addf %199, %240 : vector<2x8x8xf32>
    %c95 = arith.constant 95 : index
    %242 = memref.load %arg0[%c95] : memref<180xf32, #tpu.memory_space<smem>>
    %243 = vector.broadcast %242 : f32 to vector<2x8x8xf32>
    %244 = arith.mulf %243, %221 : vector<2x8x8xf32>
    %245 = arith.addf %203, %244 : vector<2x8x8xf32>
    %c113 = arith.constant 113 : index
    %246 = memref.load %arg0[%c113] : memref<180xf32, #tpu.memory_space<smem>>
    %247 = vector.broadcast %246 : f32 to vector<2x8x8xf32>
    %248 = arith.mulf %247, %221 : vector<2x8x8xf32>
    %249 = arith.addf %207, %248 : vector<2x8x8xf32>
    %c131 = arith.constant 131 : index
    %250 = memref.load %arg0[%c131] : memref<180xf32, #tpu.memory_space<smem>>
    %251 = vector.broadcast %250 : f32 to vector<2x8x8xf32>
    %252 = arith.mulf %251, %221 : vector<2x8x8xf32>
    %253 = arith.addf %211, %252 : vector<2x8x8xf32>
    %c149 = arith.constant 149 : index
    %254 = memref.load %arg0[%c149] : memref<180xf32, #tpu.memory_space<smem>>
    %255 = vector.broadcast %254 : f32 to vector<2x8x8xf32>
    %256 = arith.mulf %255, %221 : vector<2x8x8xf32>
    %257 = arith.addf %215, %256 : vector<2x8x8xf32>
    %c167 = arith.constant 167 : index
    %258 = memref.load %arg0[%c167] : memref<180xf32, #tpu.memory_space<smem>>
    %259 = vector.broadcast %258 : f32 to vector<2x8x8xf32>
    %260 = arith.mulf %259, %221 : vector<2x8x8xf32>
    %261 = arith.addf %219, %260 : vector<2x8x8xf32>
    %c0_45 = arith.constant 0 : index
    %c0_46 = arith.constant 0 : index
    %c0_47 = arith.constant 0 : index
    %c0_48 = arith.constant 0 : index
    %c3_49 = arith.constant 3 : index
    %c0_50 = arith.constant 0 : index
    %262 = vector.load %arg1[%c0_45, %c0_46, %c0_47, %c0_48, %c3_49, %c0_50] : memref<2x2x2x2x11x11xf32, #tpu.memory_space<vmem>>, vector<1x1x1x2x8x8xf32>
    %263 = vector.shape_cast %262 : vector<1x1x1x2x8x8xf32> to vector<2x8x8xf32>
    %c6 = arith.constant 6 : index
    %264 = memref.load %arg0[%c6] : memref<180xf32, #tpu.memory_space<smem>>
    %265 = vector.broadcast %264 : f32 to vector<2x8x8xf32>
    %266 = arith.mulf %265, %263 : vector<2x8x8xf32>
    %267 = arith.addf %225, %266 : vector<2x8x8xf32>
    %c24 = arith.constant 24 : index
    %268 = memref.load %arg0[%c24] : memref<180xf32, #tpu.memory_space<smem>>
    %269 = vector.broadcast %268 : f32 to vector<2x8x8xf32>
    %270 = arith.mulf %269, %263 : vector<2x8x8xf32>
    %271 = arith.addf %229, %270 : vector<2x8x8xf32>
    %c42 = arith.constant 42 : index
    %272 = memref.load %arg0[%c42] : memref<180xf32, #tpu.memory_space<smem>>
    %273 = vector.broadcast %272 : f32 to vector<2x8x8xf32>
    %274 = arith.mulf %273, %263 : vector<2x8x8xf32>
    %275 = arith.addf %233, %274 : vector<2x8x8xf32>
    %c60 = arith.constant 60 : index
    %276 = memref.load %arg0[%c60] : memref<180xf32, #tpu.memory_space<smem>>
    %277 = vector.broadcast %276 : f32 to vector<2x8x8xf32>
    %278 = arith.mulf %277, %263 : vector<2x8x8xf32>
    %279 = arith.addf %237, %278 : vector<2x8x8xf32>
    %c78 = arith.constant 78 : index
    %280 = memref.load %arg0[%c78] : memref<180xf32, #tpu.memory_space<smem>>
    %281 = vector.broadcast %280 : f32 to vector<2x8x8xf32>
    %282 = arith.mulf %281, %263 : vector<2x8x8xf32>
    %283 = arith.addf %241, %282 : vector<2x8x8xf32>
    %c96 = arith.constant 96 : index
    %284 = memref.load %arg0[%c96] : memref<180xf32, #tpu.memory_space<smem>>
    %285 = vector.broadcast %284 : f32 to vector<2x8x8xf32>
    %286 = arith.mulf %285, %263 : vector<2x8x8xf32>
    %287 = arith.addf %245, %286 : vector<2x8x8xf32>
    %c114 = arith.constant 114 : index
    %288 = memref.load %arg0[%c114] : memref<180xf32, #tpu.memory_space<smem>>
    %289 = vector.broadcast %288 : f32 to vector<2x8x8xf32>
    %290 = arith.mulf %289, %263 : vector<2x8x8xf32>
    %291 = arith.addf %249, %290 : vector<2x8x8xf32>
    %c132 = arith.constant 132 : index
    %292 = memref.load %arg0[%c132] : memref<180xf32, #tpu.memory_space<smem>>
    %293 = vector.broadcast %292 : f32 to vector<2x8x8xf32>
    %294 = arith.mulf %293, %263 : vector<2x8x8xf32>
    %295 = arith.addf %253, %294 : vector<2x8x8xf32>
    %c150 = arith.constant 150 : index
    %296 = memref.load %arg0[%c150] : memref<180xf32, #tpu.memory_space<smem>>
    %297 = vector.broadcast %296 : f32 to vector<2x8x8xf32>
    %298 = arith.mulf %297, %263 : vector<2x8x8xf32>
    %299 = arith.addf %257, %298 : vector<2x8x8xf32>
    %c168 = arith.constant 168 : index
    %300 = memref.load %arg0[%c168] : memref<180xf32, #tpu.memory_space<smem>>
    %301 = vector.broadcast %300 : f32 to vector<2x8x8xf32>
    %302 = arith.mulf %301, %263 : vector<2x8x8xf32>
    %303 = arith.addf %261, %302 : vector<2x8x8xf32>
    %c0_51 = arith.constant 0 : index
    %c1_52 = arith.constant 1 : index
    %c0_53 = arith.constant 0 : index
    %c0_54 = arith.constant 0 : index
    %c3_55 = arith.constant 3 : index
    %c1_56 = arith.constant 1 : index
    %304 = vector.load %arg1[%c0_51, %c1_52, %c0_53, %c0_54, %c3_55, %c1_56] : memref<2x2x2x2x11x11xf32, #tpu.memory_space<vmem>>, vector<1x1x1x2x8x8xf32>
    %305 = vector.shape_cast %304 : vector<1x1x1x2x8x8xf32> to vector<2x8x8xf32>
    %c7 = arith.constant 7 : index
    %306 = memref.load %arg0[%c7] : memref<180xf32, #tpu.memory_space<smem>>
    %307 = vector.broadcast %306 : f32 to vector<2x8x8xf32>
    %308 = arith.mulf %307, %305 : vector<2x8x8xf32>
    %309 = arith.addf %267, %308 : vector<2x8x8xf32>
    %c25 = arith.constant 25 : index
    %310 = memref.load %arg0[%c25] : memref<180xf32, #tpu.memory_space<smem>>
    %311 = vector.broadcast %310 : f32 to vector<2x8x8xf32>
    %312 = arith.mulf %311, %305 : vector<2x8x8xf32>
    %313 = arith.addf %271, %312 : vector<2x8x8xf32>
    %c43 = arith.constant 43 : index
    %314 = memref.load %arg0[%c43] : memref<180xf32, #tpu.memory_space<smem>>
    %315 = vector.broadcast %314 : f32 to vector<2x8x8xf32>
    %316 = arith.mulf %315, %305 : vector<2x8x8xf32>
    %317 = arith.addf %275, %316 : vector<2x8x8xf32>
    %c61 = arith.constant 61 : index
    %318 = memref.load %arg0[%c61] : memref<180xf32, #tpu.memory_space<smem>>
    %319 = vector.broadcast %318 : f32 to vector<2x8x8xf32>
    %320 = arith.mulf %319, %305 : vector<2x8x8xf32>
    %321 = arith.addf %279, %320 : vector<2x8x8xf32>
    %c79 = arith.constant 79 : index
    %322 = memref.load %arg0[%c79] : memref<180xf32, #tpu.memory_space<smem>>
    %323 = vector.broadcast %322 : f32 to vector<2x8x8xf32>
    %324 = arith.mulf %323, %305 : vector<2x8x8xf32>
    %325 = arith.addf %283, %324 : vector<2x8x8xf32>
    %c97 = arith.constant 97 : index
    %326 = memref.load %arg0[%c97] : memref<180xf32, #tpu.memory_space<smem>>
    %327 = vector.broadcast %326 : f32 to vector<2x8x8xf32>
    %328 = arith.mulf %327, %305 : vector<2x8x8xf32>
    %329 = arith.addf %287, %328 : vector<2x8x8xf32>
    %c115 = arith.constant 115 : index
    %330 = memref.load %arg0[%c115] : memref<180xf32, #tpu.memory_space<smem>>
    %331 = vector.broadcast %330 : f32 to vector<2x8x8xf32>
    %332 = arith.mulf %331, %305 : vector<2x8x8xf32>
    %333 = arith.addf %291, %332 : vector<2x8x8xf32>
    %c133 = arith.constant 133 : index
    %334 = memref.load %arg0[%c133] : memref<180xf32, #tpu.memory_space<smem>>
    %335 = vector.broadcast %334 : f32 to vector<2x8x8xf32>
    %336 = arith.mulf %335, %305 : vector<2x8x8xf32>
    %337 = arith.addf %295, %336 : vector<2x8x8xf32>
    %c151 = arith.constant 151 : index
    %338 = memref.load %arg0[%c151] : memref<180xf32, #tpu.memory_space<smem>>
    %339 = vector.broadcast %338 : f32 to vector<2x8x8xf32>
    %340 = arith.mulf %339, %305 : vector<2x8x8xf32>
    %341 = arith.addf %299, %340 : vector<2x8x8xf32>
    %c169 = arith.constant 169 : index
    %342 = memref.load %arg0[%c169] : memref<180xf32, #tpu.memory_space<smem>>
    %343 = vector.broadcast %342 : f32 to vector<2x8x8xf32>
    %344 = arith.mulf %343, %305 : vector<2x8x8xf32>
    %345 = arith.addf %303, %344 : vector<2x8x8xf32>
    %c0_57 = arith.constant 0 : index
    %c0_58 = arith.constant 0 : index
    %c0_59 = arith.constant 0 : index
    %c0_60 = arith.constant 0 : index
    %c3_61 = arith.constant 3 : index
    %c3_62 = arith.constant 3 : index
    %346 = vector.load %arg1[%c0_57, %c0_58, %c0_59, %c0_60, %c3_61, %c3_62] : memref<2x2x2x2x11x11xf32, #tpu.memory_space<vmem>>, vector<1x1x1x2x8x8xf32>
    %347 = vector.shape_cast %346 : vector<1x1x1x2x8x8xf32> to vector<2x8x8xf32>
    %c8 = arith.constant 8 : index
    %348 = memref.load %arg0[%c8] : memref<180xf32, #tpu.memory_space<smem>>
    %349 = vector.broadcast %348 : f32 to vector<2x8x8xf32>
    %350 = arith.mulf %349, %347 : vector<2x8x8xf32>
    %351 = arith.addf %309, %350 : vector<2x8x8xf32>
    %c26 = arith.constant 26 : index
    %352 = memref.load %arg0[%c26] : memref<180xf32, #tpu.memory_space<smem>>
    %353 = vector.broadcast %352 : f32 to vector<2x8x8xf32>
    %354 = arith.mulf %353, %347 : vector<2x8x8xf32>
    %355 = arith.addf %313, %354 : vector<2x8x8xf32>
    %c44 = arith.constant 44 : index
    %356 = memref.load %arg0[%c44] : memref<180xf32, #tpu.memory_space<smem>>
    %357 = vector.broadcast %356 : f32 to vector<2x8x8xf32>
    %358 = arith.mulf %357, %347 : vector<2x8x8xf32>
    %359 = arith.addf %317, %358 : vector<2x8x8xf32>
    %c62 = arith.constant 62 : index
    %360 = memref.load %arg0[%c62] : memref<180xf32, #tpu.memory_space<smem>>
    %361 = vector.broadcast %360 : f32 to vector<2x8x8xf32>
    %362 = arith.mulf %361, %347 : vector<2x8x8xf32>
    %363 = arith.addf %321, %362 : vector<2x8x8xf32>
    %c80 = arith.constant 80 : index
    %364 = memref.load %arg0[%c80] : memref<180xf32, #tpu.memory_space<smem>>
    %365 = vector.broadcast %364 : f32 to vector<2x8x8xf32>
    %366 = arith.mulf %365, %347 : vector<2x8x8xf32>
    %367 = arith.addf %325, %366 : vector<2x8x8xf32>
    %c98 = arith.constant 98 : index
    %368 = memref.load %arg0[%c98] : memref<180xf32, #tpu.memory_space<smem>>
    %369 = vector.broadcast %368 : f32 to vector<2x8x8xf32>
    %370 = arith.mulf %369, %347 : vector<2x8x8xf32>
    %371 = arith.addf %329, %370 : vector<2x8x8xf32>
    %c116 = arith.constant 116 : index
    %372 = memref.load %arg0[%c116] : memref<180xf32, #tpu.memory_space<smem>>
    %373 = vector.broadcast %372 : f32 to vector<2x8x8xf32>
    %374 = arith.mulf %373, %347 : vector<2x8x8xf32>
    %375 = arith.addf %333, %374 : vector<2x8x8xf32>
    %c134 = arith.constant 134 : index
    %376 = memref.load %arg0[%c134] : memref<180xf32, #tpu.memory_space<smem>>
    %377 = vector.broadcast %376 : f32 to vector<2x8x8xf32>
    %378 = arith.mulf %377, %347 : vector<2x8x8xf32>
    %379 = arith.addf %337, %378 : vector<2x8x8xf32>
    %c152 = arith.constant 152 : index
    %380 = memref.load %arg0[%c152] : memref<180xf32, #tpu.memory_space<smem>>
    %381 = vector.broadcast %380 : f32 to vector<2x8x8xf32>
    %382 = arith.mulf %381, %347 : vector<2x8x8xf32>
    %383 = arith.addf %341, %382 : vector<2x8x8xf32>
    %c170 = arith.constant 170 : index
    %384 = memref.load %arg0[%c170] : memref<180xf32, #tpu.memory_space<smem>>
    %385 = vector.broadcast %384 : f32 to vector<2x8x8xf32>
    %386 = arith.mulf %385, %347 : vector<2x8x8xf32>
    %387 = arith.addf %345, %386 : vector<2x8x8xf32>
    %c0_63 = arith.constant 0 : index
    %c0_64 = arith.constant 0 : index
    %c1_65 = arith.constant 1 : index
    %c0_66 = arith.constant 0 : index
    %c0_67 = arith.constant 0 : index
    %c0_68 = arith.constant 0 : index
    %388 = vector.load %arg1[%c0_63, %c0_64, %c1_65, %c0_66, %c0_67, %c0_68] : memref<2x2x2x2x11x11xf32, #tpu.memory_space<vmem>>, vector<1x1x1x2x8x8xf32>
    %389 = vector.shape_cast %388 : vector<1x1x1x2x8x8xf32> to vector<2x8x8xf32>
    %c9 = arith.constant 9 : index
    %390 = memref.load %arg0[%c9] : memref<180xf32, #tpu.memory_space<smem>>
    %391 = vector.broadcast %390 : f32 to vector<2x8x8xf32>
    %392 = arith.mulf %391, %389 : vector<2x8x8xf32>
    %393 = arith.addf %351, %392 : vector<2x8x8xf32>
    %c27 = arith.constant 27 : index
    %394 = memref.load %arg0[%c27] : memref<180xf32, #tpu.memory_space<smem>>
    %395 = vector.broadcast %394 : f32 to vector<2x8x8xf32>
    %396 = arith.mulf %395, %389 : vector<2x8x8xf32>
    %397 = arith.addf %355, %396 : vector<2x8x8xf32>
    %c45 = arith.constant 45 : index
    %398 = memref.load %arg0[%c45] : memref<180xf32, #tpu.memory_space<smem>>
    %399 = vector.broadcast %398 : f32 to vector<2x8x8xf32>
    %400 = arith.mulf %399, %389 : vector<2x8x8xf32>
    %401 = arith.addf %359, %400 : vector<2x8x8xf32>
    %c63 = arith.constant 63 : index
    %402 = memref.load %arg0[%c63] : memref<180xf32, #tpu.memory_space<smem>>
    %403 = vector.broadcast %402 : f32 to vector<2x8x8xf32>
    %404 = arith.mulf %403, %389 : vector<2x8x8xf32>
    %405 = arith.addf %363, %404 : vector<2x8x8xf32>
    %c81 = arith.constant 81 : index
    %406 = memref.load %arg0[%c81] : memref<180xf32, #tpu.memory_space<smem>>
    %407 = vector.broadcast %406 : f32 to vector<2x8x8xf32>
    %408 = arith.mulf %407, %389 : vector<2x8x8xf32>
    %409 = arith.addf %367, %408 : vector<2x8x8xf32>
    %c99 = arith.constant 99 : index
    %410 = memref.load %arg0[%c99] : memref<180xf32, #tpu.memory_space<smem>>
    %411 = vector.broadcast %410 : f32 to vector<2x8x8xf32>
    %412 = arith.mulf %411, %389 : vector<2x8x8xf32>
    %413 = arith.addf %371, %412 : vector<2x8x8xf32>
    %c117 = arith.constant 117 : index
    %414 = memref.load %arg0[%c117] : memref<180xf32, #tpu.memory_space<smem>>
    %415 = vector.broadcast %414 : f32 to vector<2x8x8xf32>
    %416 = arith.mulf %415, %389 : vector<2x8x8xf32>
    %417 = arith.addf %375, %416 : vector<2x8x8xf32>
    %c135 = arith.constant 135 : index
    %418 = memref.load %arg0[%c135] : memref<180xf32, #tpu.memory_space<smem>>
    %419 = vector.broadcast %418 : f32 to vector<2x8x8xf32>
    %420 = arith.mulf %419, %389 : vector<2x8x8xf32>
    %421 = arith.addf %379, %420 : vector<2x8x8xf32>
    %c153 = arith.constant 153 : index
    %422 = memref.load %arg0[%c153] : memref<180xf32, #tpu.memory_space<smem>>
    %423 = vector.broadcast %422 : f32 to vector<2x8x8xf32>
    %424 = arith.mulf %423, %389 : vector<2x8x8xf32>
    %425 = arith.addf %383, %424 : vector<2x8x8xf32>
    %c171 = arith.constant 171 : index
    %426 = memref.load %arg0[%c171] : memref<180xf32, #tpu.memory_space<smem>>
    %427 = vector.broadcast %426 : f32 to vector<2x8x8xf32>
    %428 = arith.mulf %427, %389 : vector<2x8x8xf32>
    %429 = arith.addf %387, %428 : vector<2x8x8xf32>
    %c0_69 = arith.constant 0 : index
    %c1_70 = arith.constant 1 : index
    %c1_71 = arith.constant 1 : index
    %c0_72 = arith.constant 0 : index
    %c0_73 = arith.constant 0 : index
    %c1_74 = arith.constant 1 : index
    %430 = vector.load %arg1[%c0_69, %c1_70, %c1_71, %c0_72, %c0_73, %c1_74] : memref<2x2x2x2x11x11xf32, #tpu.memory_space<vmem>>, vector<1x1x1x2x8x8xf32>
    %431 = vector.shape_cast %430 : vector<1x1x1x2x8x8xf32> to vector<2x8x8xf32>
    %c10 = arith.constant 10 : index
    %432 = memref.load %arg0[%c10] : memref<180xf32, #tpu.memory_space<smem>>
    %433 = vector.broadcast %432 : f32 to vector<2x8x8xf32>
    %434 = arith.mulf %433, %431 : vector<2x8x8xf32>
    %435 = arith.addf %393, %434 : vector<2x8x8xf32>
    %c28 = arith.constant 28 : index
    %436 = memref.load %arg0[%c28] : memref<180xf32, #tpu.memory_space<smem>>
    %437 = vector.broadcast %436 : f32 to vector<2x8x8xf32>
    %438 = arith.mulf %437, %431 : vector<2x8x8xf32>
    %439 = arith.addf %397, %438 : vector<2x8x8xf32>
    %c46 = arith.constant 46 : index
    %440 = memref.load %arg0[%c46] : memref<180xf32, #tpu.memory_space<smem>>
    %441 = vector.broadcast %440 : f32 to vector<2x8x8xf32>
    %442 = arith.mulf %441, %431 : vector<2x8x8xf32>
    %443 = arith.addf %401, %442 : vector<2x8x8xf32>
    %c64 = arith.constant 64 : index
    %444 = memref.load %arg0[%c64] : memref<180xf32, #tpu.memory_space<smem>>
    %445 = vector.broadcast %444 : f32 to vector<2x8x8xf32>
    %446 = arith.mulf %445, %431 : vector<2x8x8xf32>
    %447 = arith.addf %405, %446 : vector<2x8x8xf32>
    %c82 = arith.constant 82 : index
    %448 = memref.load %arg0[%c82] : memref<180xf32, #tpu.memory_space<smem>>
    %449 = vector.broadcast %448 : f32 to vector<2x8x8xf32>
    %450 = arith.mulf %449, %431 : vector<2x8x8xf32>
    %451 = arith.addf %409, %450 : vector<2x8x8xf32>
    %c100 = arith.constant 100 : index
    %452 = memref.load %arg0[%c100] : memref<180xf32, #tpu.memory_space<smem>>
    %453 = vector.broadcast %452 : f32 to vector<2x8x8xf32>
    %454 = arith.mulf %453, %431 : vector<2x8x8xf32>
    %455 = arith.addf %413, %454 : vector<2x8x8xf32>
    %c118 = arith.constant 118 : index
    %456 = memref.load %arg0[%c118] : memref<180xf32, #tpu.memory_space<smem>>
    %457 = vector.broadcast %456 : f32 to vector<2x8x8xf32>
    %458 = arith.mulf %457, %431 : vector<2x8x8xf32>
    %459 = arith.addf %417, %458 : vector<2x8x8xf32>
    %c136 = arith.constant 136 : index
    %460 = memref.load %arg0[%c136] : memref<180xf32, #tpu.memory_space<smem>>
    %461 = vector.broadcast %460 : f32 to vector<2x8x8xf32>
    %462 = arith.mulf %461, %431 : vector<2x8x8xf32>
    %463 = arith.addf %421, %462 : vector<2x8x8xf32>
    %c154 = arith.constant 154 : index
    %464 = memref.load %arg0[%c154] : memref<180xf32, #tpu.memory_space<smem>>
    %465 = vector.broadcast %464 : f32 to vector<2x8x8xf32>
    %466 = arith.mulf %465, %431 : vector<2x8x8xf32>
    %467 = arith.addf %425, %466 : vector<2x8x8xf32>
    %c172 = arith.constant 172 : index
    %468 = memref.load %arg0[%c172] : memref<180xf32, #tpu.memory_space<smem>>
    %469 = vector.broadcast %468 : f32 to vector<2x8x8xf32>
    %470 = arith.mulf %469, %431 : vector<2x8x8xf32>
    %471 = arith.addf %429, %470 : vector<2x8x8xf32>
    %c0_75 = arith.constant 0 : index
    %c0_76 = arith.constant 0 : index
    %c1_77 = arith.constant 1 : index
    %c0_78 = arith.constant 0 : index
    %c0_79 = arith.constant 0 : index
    %c3_80 = arith.constant 3 : index
    %472 = vector.load %arg1[%c0_75, %c0_76, %c1_77, %c0_78, %c0_79, %c3_80] : memref<2x2x2x2x11x11xf32, #tpu.memory_space<vmem>>, vector<1x1x1x2x8x8xf32>
    %473 = vector.shape_cast %472 : vector<1x1x1x2x8x8xf32> to vector<2x8x8xf32>
    %c11 = arith.constant 11 : index
    %474 = memref.load %arg0[%c11] : memref<180xf32, #tpu.memory_space<smem>>
    %475 = vector.broadcast %474 : f32 to vector<2x8x8xf32>
    %476 = arith.mulf %475, %473 : vector<2x8x8xf32>
    %477 = arith.addf %435, %476 : vector<2x8x8xf32>
    %c29 = arith.constant 29 : index
    %478 = memref.load %arg0[%c29] : memref<180xf32, #tpu.memory_space<smem>>
    %479 = vector.broadcast %478 : f32 to vector<2x8x8xf32>
    %480 = arith.mulf %479, %473 : vector<2x8x8xf32>
    %481 = arith.addf %439, %480 : vector<2x8x8xf32>
    %c47 = arith.constant 47 : index
    %482 = memref.load %arg0[%c47] : memref<180xf32, #tpu.memory_space<smem>>
    %483 = vector.broadcast %482 : f32 to vector<2x8x8xf32>
    %484 = arith.mulf %483, %473 : vector<2x8x8xf32>
    %485 = arith.addf %443, %484 : vector<2x8x8xf32>
    %c65 = arith.constant 65 : index
    %486 = memref.load %arg0[%c65] : memref<180xf32, #tpu.memory_space<smem>>
    %487 = vector.broadcast %486 : f32 to vector<2x8x8xf32>
    %488 = arith.mulf %487, %473 : vector<2x8x8xf32>
    %489 = arith.addf %447, %488 : vector<2x8x8xf32>
    %c83 = arith.constant 83 : index
    %490 = memref.load %arg0[%c83] : memref<180xf32, #tpu.memory_space<smem>>
    %491 = vector.broadcast %490 : f32 to vector<2x8x8xf32>
    %492 = arith.mulf %491, %473 : vector<2x8x8xf32>
    %493 = arith.addf %451, %492 : vector<2x8x8xf32>
    %c101 = arith.constant 101 : index
    %494 = memref.load %arg0[%c101] : memref<180xf32, #tpu.memory_space<smem>>
    %495 = vector.broadcast %494 : f32 to vector<2x8x8xf32>
    %496 = arith.mulf %495, %473 : vector<2x8x8xf32>
    %497 = arith.addf %455, %496 : vector<2x8x8xf32>
    %c119 = arith.constant 119 : index
    %498 = memref.load %arg0[%c119] : memref<180xf32, #tpu.memory_space<smem>>
    %499 = vector.broadcast %498 : f32 to vector<2x8x8xf32>
    %500 = arith.mulf %499, %473 : vector<2x8x8xf32>
    %501 = arith.addf %459, %500 : vector<2x8x8xf32>
    %c137 = arith.constant 137 : index
    %502 = memref.load %arg0[%c137] : memref<180xf32, #tpu.memory_space<smem>>
    %503 = vector.broadcast %502 : f32 to vector<2x8x8xf32>
    %504 = arith.mulf %503, %473 : vector<2x8x8xf32>
    %505 = arith.addf %463, %504 : vector<2x8x8xf32>
    %c155 = arith.constant 155 : index
    %506 = memref.load %arg0[%c155] : memref<180xf32, #tpu.memory_space<smem>>
    %507 = vector.broadcast %506 : f32 to vector<2x8x8xf32>
    %508 = arith.mulf %507, %473 : vector<2x8x8xf32>
    %509 = arith.addf %467, %508 : vector<2x8x8xf32>
    %c173 = arith.constant 173 : index
    %510 = memref.load %arg0[%c173] : memref<180xf32, #tpu.memory_space<smem>>
    %511 = vector.broadcast %510 : f32 to vector<2x8x8xf32>
    %512 = arith.mulf %511, %473 : vector<2x8x8xf32>
    %513 = arith.addf %471, %512 : vector<2x8x8xf32>
    %c1_81 = arith.constant 1 : index
    %c0_82 = arith.constant 0 : index
    %c1_83 = arith.constant 1 : index
    %c0_84 = arith.constant 0 : index
    %c1_85 = arith.constant 1 : index
    %c0_86 = arith.constant 0 : index
    %514 = vector.load %arg1[%c1_81, %c0_82, %c1_83, %c0_84, %c1_85, %c0_86] : memref<2x2x2x2x11x11xf32, #tpu.memory_space<vmem>>, vector<1x1x1x2x8x8xf32>
    %515 = vector.shape_cast %514 : vector<1x1x1x2x8x8xf32> to vector<2x8x8xf32>
    %c12 = arith.constant 12 : index
    %516 = memref.load %arg0[%c12] : memref<180xf32, #tpu.memory_space<smem>>
    %517 = vector.broadcast %516 : f32 to vector<2x8x8xf32>
    %518 = arith.mulf %517, %515 : vector<2x8x8xf32>
    %519 = arith.addf %477, %518 : vector<2x8x8xf32>
    %c30 = arith.constant 30 : index
    %520 = memref.load %arg0[%c30] : memref<180xf32, #tpu.memory_space<smem>>
    %521 = vector.broadcast %520 : f32 to vector<2x8x8xf32>
    %522 = arith.mulf %521, %515 : vector<2x8x8xf32>
    %523 = arith.addf %481, %522 : vector<2x8x8xf32>
    %c48 = arith.constant 48 : index
    %524 = memref.load %arg0[%c48] : memref<180xf32, #tpu.memory_space<smem>>
    %525 = vector.broadcast %524 : f32 to vector<2x8x8xf32>
    %526 = arith.mulf %525, %515 : vector<2x8x8xf32>
    %527 = arith.addf %485, %526 : vector<2x8x8xf32>
    %c66 = arith.constant 66 : index
    %528 = memref.load %arg0[%c66] : memref<180xf32, #tpu.memory_space<smem>>
    %529 = vector.broadcast %528 : f32 to vector<2x8x8xf32>
    %530 = arith.mulf %529, %515 : vector<2x8x8xf32>
    %531 = arith.addf %489, %530 : vector<2x8x8xf32>
    %c84 = arith.constant 84 : index
    %532 = memref.load %arg0[%c84] : memref<180xf32, #tpu.memory_space<smem>>
    %533 = vector.broadcast %532 : f32 to vector<2x8x8xf32>
    %534 = arith.mulf %533, %515 : vector<2x8x8xf32>
    %535 = arith.addf %493, %534 : vector<2x8x8xf32>
    %c102 = arith.constant 102 : index
    %536 = memref.load %arg0[%c102] : memref<180xf32, #tpu.memory_space<smem>>
    %537 = vector.broadcast %536 : f32 to vector<2x8x8xf32>
    %538 = arith.mulf %537, %515 : vector<2x8x8xf32>
    %539 = arith.addf %497, %538 : vector<2x8x8xf32>
    %c120 = arith.constant 120 : index
    %540 = memref.load %arg0[%c120] : memref<180xf32, #tpu.memory_space<smem>>
    %541 = vector.broadcast %540 : f32 to vector<2x8x8xf32>
    %542 = arith.mulf %541, %515 : vector<2x8x8xf32>
    %543 = arith.addf %501, %542 : vector<2x8x8xf32>
    %c138 = arith.constant 138 : index
    %544 = memref.load %arg0[%c138] : memref<180xf32, #tpu.memory_space<smem>>
    %545 = vector.broadcast %544 : f32 to vector<2x8x8xf32>
    %546 = arith.mulf %545, %515 : vector<2x8x8xf32>
    %547 = arith.addf %505, %546 : vector<2x8x8xf32>
    %c156 = arith.constant 156 : index
    %548 = memref.load %arg0[%c156] : memref<180xf32, #tpu.memory_space<smem>>
    %549 = vector.broadcast %548 : f32 to vector<2x8x8xf32>
    %550 = arith.mulf %549, %515 : vector<2x8x8xf32>
    %551 = arith.addf %509, %550 : vector<2x8x8xf32>
    %c174 = arith.constant 174 : index
    %552 = memref.load %arg0[%c174] : memref<180xf32, #tpu.memory_space<smem>>
    %553 = vector.broadcast %552 : f32 to vector<2x8x8xf32>
    %554 = arith.mulf %553, %515 : vector<2x8x8xf32>
    %555 = arith.addf %513, %554 : vector<2x8x8xf32>
    %c1_87 = arith.constant 1 : index
    %c1_88 = arith.constant 1 : index
    %c1_89 = arith.constant 1 : index
    %c0_90 = arith.constant 0 : index
    %c1_91 = arith.constant 1 : index
    %c1_92 = arith.constant 1 : index
    %556 = vector.load %arg1[%c1_87, %c1_88, %c1_89, %c0_90, %c1_91, %c1_92] : memref<2x2x2x2x11x11xf32, #tpu.memory_space<vmem>>, vector<1x1x1x2x8x8xf32>
    %557 = vector.shape_cast %556 : vector<1x1x1x2x8x8xf32> to vector<2x8x8xf32>
    %c13 = arith.constant 13 : index
    %558 = memref.load %arg0[%c13] : memref<180xf32, #tpu.memory_space<smem>>
    %559 = vector.broadcast %558 : f32 to vector<2x8x8xf32>
    %560 = arith.mulf %559, %557 : vector<2x8x8xf32>
    %561 = arith.addf %519, %560 : vector<2x8x8xf32>
    %c31 = arith.constant 31 : index
    %562 = memref.load %arg0[%c31] : memref<180xf32, #tpu.memory_space<smem>>
    %563 = vector.broadcast %562 : f32 to vector<2x8x8xf32>
    %564 = arith.mulf %563, %557 : vector<2x8x8xf32>
    %565 = arith.addf %523, %564 : vector<2x8x8xf32>
    %c49 = arith.constant 49 : index
    %566 = memref.load %arg0[%c49] : memref<180xf32, #tpu.memory_space<smem>>
    %567 = vector.broadcast %566 : f32 to vector<2x8x8xf32>
    %568 = arith.mulf %567, %557 : vector<2x8x8xf32>
    %569 = arith.addf %527, %568 : vector<2x8x8xf32>
    %c67 = arith.constant 67 : index
    %570 = memref.load %arg0[%c67] : memref<180xf32, #tpu.memory_space<smem>>
    %571 = vector.broadcast %570 : f32 to vector<2x8x8xf32>
    %572 = arith.mulf %571, %557 : vector<2x8x8xf32>
    %573 = arith.addf %531, %572 : vector<2x8x8xf32>
    %c85 = arith.constant 85 : index
    %574 = memref.load %arg0[%c85] : memref<180xf32, #tpu.memory_space<smem>>
    %575 = vector.broadcast %574 : f32 to vector<2x8x8xf32>
    %576 = arith.mulf %575, %557 : vector<2x8x8xf32>
    %577 = arith.addf %535, %576 : vector<2x8x8xf32>
    %c103 = arith.constant 103 : index
    %578 = memref.load %arg0[%c103] : memref<180xf32, #tpu.memory_space<smem>>
    %579 = vector.broadcast %578 : f32 to vector<2x8x8xf32>
    %580 = arith.mulf %579, %557 : vector<2x8x8xf32>
    %581 = arith.addf %539, %580 : vector<2x8x8xf32>
    %c121 = arith.constant 121 : index
    %582 = memref.load %arg0[%c121] : memref<180xf32, #tpu.memory_space<smem>>
    %583 = vector.broadcast %582 : f32 to vector<2x8x8xf32>
    %584 = arith.mulf %583, %557 : vector<2x8x8xf32>
    %585 = arith.addf %543, %584 : vector<2x8x8xf32>
    %c139 = arith.constant 139 : index
    %586 = memref.load %arg0[%c139] : memref<180xf32, #tpu.memory_space<smem>>
    %587 = vector.broadcast %586 : f32 to vector<2x8x8xf32>
    %588 = arith.mulf %587, %557 : vector<2x8x8xf32>
    %589 = arith.addf %547, %588 : vector<2x8x8xf32>
    %c157 = arith.constant 157 : index
    %590 = memref.load %arg0[%c157] : memref<180xf32, #tpu.memory_space<smem>>
    %591 = vector.broadcast %590 : f32 to vector<2x8x8xf32>
    %592 = arith.mulf %591, %557 : vector<2x8x8xf32>
    %593 = arith.addf %551, %592 : vector<2x8x8xf32>
    %c175 = arith.constant 175 : index
    %594 = memref.load %arg0[%c175] : memref<180xf32, #tpu.memory_space<smem>>
    %595 = vector.broadcast %594 : f32 to vector<2x8x8xf32>
    %596 = arith.mulf %595, %557 : vector<2x8x8xf32>
    %597 = arith.addf %555, %596 : vector<2x8x8xf32>
    %c1_93 = arith.constant 1 : index
    %c0_94 = arith.constant 0 : index
    %c1_95 = arith.constant 1 : index
    %c0_96 = arith.constant 0 : index
    %c1_97 = arith.constant 1 : index
    %c3_98 = arith.constant 3 : index
    %598 = vector.load %arg1[%c1_93, %c0_94, %c1_95, %c0_96, %c1_97, %c3_98] : memref<2x2x2x2x11x11xf32, #tpu.memory_space<vmem>>, vector<1x1x1x2x8x8xf32>
    %599 = vector.shape_cast %598 : vector<1x1x1x2x8x8xf32> to vector<2x8x8xf32>
    %c14 = arith.constant 14 : index
    %600 = memref.load %arg0[%c14] : memref<180xf32, #tpu.memory_space<smem>>
    %601 = vector.broadcast %600 : f32 to vector<2x8x8xf32>
    %602 = arith.mulf %601, %599 : vector<2x8x8xf32>
    %603 = arith.addf %561, %602 : vector<2x8x8xf32>
    %c32 = arith.constant 32 : index
    %604 = memref.load %arg0[%c32] : memref<180xf32, #tpu.memory_space<smem>>
    %605 = vector.broadcast %604 : f32 to vector<2x8x8xf32>
    %606 = arith.mulf %605, %599 : vector<2x8x8xf32>
    %607 = arith.addf %565, %606 : vector<2x8x8xf32>
    %c50 = arith.constant 50 : index
    %608 = memref.load %arg0[%c50] : memref<180xf32, #tpu.memory_space<smem>>
    %609 = vector.broadcast %608 : f32 to vector<2x8x8xf32>
    %610 = arith.mulf %609, %599 : vector<2x8x8xf32>
    %611 = arith.addf %569, %610 : vector<2x8x8xf32>
    %c68 = arith.constant 68 : index
    %612 = memref.load %arg0[%c68] : memref<180xf32, #tpu.memory_space<smem>>
    %613 = vector.broadcast %612 : f32 to vector<2x8x8xf32>
    %614 = arith.mulf %613, %599 : vector<2x8x8xf32>
    %615 = arith.addf %573, %614 : vector<2x8x8xf32>
    %c86 = arith.constant 86 : index
    %616 = memref.load %arg0[%c86] : memref<180xf32, #tpu.memory_space<smem>>
    %617 = vector.broadcast %616 : f32 to vector<2x8x8xf32>
    %618 = arith.mulf %617, %599 : vector<2x8x8xf32>
    %619 = arith.addf %577, %618 : vector<2x8x8xf32>
    %c104 = arith.constant 104 : index
    %620 = memref.load %arg0[%c104] : memref<180xf32, #tpu.memory_space<smem>>
    %621 = vector.broadcast %620 : f32 to vector<2x8x8xf32>
    %622 = arith.mulf %621, %599 : vector<2x8x8xf32>
    %623 = arith.addf %581, %622 : vector<2x8x8xf32>
    %c122 = arith.constant 122 : index
    %624 = memref.load %arg0[%c122] : memref<180xf32, #tpu.memory_space<smem>>
    %625 = vector.broadcast %624 : f32 to vector<2x8x8xf32>
    %626 = arith.mulf %625, %599 : vector<2x8x8xf32>
    %627 = arith.addf %585, %626 : vector<2x8x8xf32>
    %c140 = arith.constant 140 : index
    %628 = memref.load %arg0[%c140] : memref<180xf32, #tpu.memory_space<smem>>
    %629 = vector.broadcast %628 : f32 to vector<2x8x8xf32>
    %630 = arith.mulf %629, %599 : vector<2x8x8xf32>
    %631 = arith.addf %589, %630 : vector<2x8x8xf32>
    %c158 = arith.constant 158 : index
    %632 = memref.load %arg0[%c158] : memref<180xf32, #tpu.memory_space<smem>>
    %633 = vector.broadcast %632 : f32 to vector<2x8x8xf32>
    %634 = arith.mulf %633, %599 : vector<2x8x8xf32>
    %635 = arith.addf %593, %634 : vector<2x8x8xf32>
    %c176 = arith.constant 176 : index
    %636 = memref.load %arg0[%c176] : memref<180xf32, #tpu.memory_space<smem>>
    %637 = vector.broadcast %636 : f32 to vector<2x8x8xf32>
    %638 = arith.mulf %637, %599 : vector<2x8x8xf32>
    %639 = arith.addf %597, %638 : vector<2x8x8xf32>
    %c0_99 = arith.constant 0 : index
    %c0_100 = arith.constant 0 : index
    %c1_101 = arith.constant 1 : index
    %c0_102 = arith.constant 0 : index
    %c3_103 = arith.constant 3 : index
    %c0_104 = arith.constant 0 : index
    %640 = vector.load %arg1[%c0_99, %c0_100, %c1_101, %c0_102, %c3_103, %c0_104] : memref<2x2x2x2x11x11xf32, #tpu.memory_space<vmem>>, vector<1x1x1x2x8x8xf32>
    %641 = vector.shape_cast %640 : vector<1x1x1x2x8x8xf32> to vector<2x8x8xf32>
    %c15 = arith.constant 15 : index
    %642 = memref.load %arg0[%c15] : memref<180xf32, #tpu.memory_space<smem>>
    %643 = vector.broadcast %642 : f32 to vector<2x8x8xf32>
    %644 = arith.mulf %643, %641 : vector<2x8x8xf32>
    %645 = arith.addf %603, %644 : vector<2x8x8xf32>
    %c33 = arith.constant 33 : index
    %646 = memref.load %arg0[%c33] : memref<180xf32, #tpu.memory_space<smem>>
    %647 = vector.broadcast %646 : f32 to vector<2x8x8xf32>
    %648 = arith.mulf %647, %641 : vector<2x8x8xf32>
    %649 = arith.addf %607, %648 : vector<2x8x8xf32>
    %c51 = arith.constant 51 : index
    %650 = memref.load %arg0[%c51] : memref<180xf32, #tpu.memory_space<smem>>
    %651 = vector.broadcast %650 : f32 to vector<2x8x8xf32>
    %652 = arith.mulf %651, %641 : vector<2x8x8xf32>
    %653 = arith.addf %611, %652 : vector<2x8x8xf32>
    %c69 = arith.constant 69 : index
    %654 = memref.load %arg0[%c69] : memref<180xf32, #tpu.memory_space<smem>>
    %655 = vector.broadcast %654 : f32 to vector<2x8x8xf32>
    %656 = arith.mulf %655, %641 : vector<2x8x8xf32>
    %657 = arith.addf %615, %656 : vector<2x8x8xf32>
    %c87 = arith.constant 87 : index
    %658 = memref.load %arg0[%c87] : memref<180xf32, #tpu.memory_space<smem>>
    %659 = vector.broadcast %658 : f32 to vector<2x8x8xf32>
    %660 = arith.mulf %659, %641 : vector<2x8x8xf32>
    %661 = arith.addf %619, %660 : vector<2x8x8xf32>
    %c105 = arith.constant 105 : index
    %662 = memref.load %arg0[%c105] : memref<180xf32, #tpu.memory_space<smem>>
    %663 = vector.broadcast %662 : f32 to vector<2x8x8xf32>
    %664 = arith.mulf %663, %641 : vector<2x8x8xf32>
    %665 = arith.addf %623, %664 : vector<2x8x8xf32>
    %c123 = arith.constant 123 : index
    %666 = memref.load %arg0[%c123] : memref<180xf32, #tpu.memory_space<smem>>
    %667 = vector.broadcast %666 : f32 to vector<2x8x8xf32>
    %668 = arith.mulf %667, %641 : vector<2x8x8xf32>
    %669 = arith.addf %627, %668 : vector<2x8x8xf32>
    %c141 = arith.constant 141 : index
    %670 = memref.load %arg0[%c141] : memref<180xf32, #tpu.memory_space<smem>>
    %671 = vector.broadcast %670 : f32 to vector<2x8x8xf32>
    %672 = arith.mulf %671, %641 : vector<2x8x8xf32>
    %673 = arith.addf %631, %672 : vector<2x8x8xf32>
    %c159 = arith.constant 159 : index
    %674 = memref.load %arg0[%c159] : memref<180xf32, #tpu.memory_space<smem>>
    %675 = vector.broadcast %674 : f32 to vector<2x8x8xf32>
    %676 = arith.mulf %675, %641 : vector<2x8x8xf32>
    %677 = arith.addf %635, %676 : vector<2x8x8xf32>
    %c177 = arith.constant 177 : index
    %678 = memref.load %arg0[%c177] : memref<180xf32, #tpu.memory_space<smem>>
    %679 = vector.broadcast %678 : f32 to vector<2x8x8xf32>
    %680 = arith.mulf %679, %641 : vector<2x8x8xf32>
    %681 = arith.addf %639, %680 : vector<2x8x8xf32>
    %c0_105 = arith.constant 0 : index
    %c1_106 = arith.constant 1 : index
    %c1_107 = arith.constant 1 : index
    %c0_108 = arith.constant 0 : index
    %c3_109 = arith.constant 3 : index
    %c1_110 = arith.constant 1 : index
    %682 = vector.load %arg1[%c0_105, %c1_106, %c1_107, %c0_108, %c3_109, %c1_110] : memref<2x2x2x2x11x11xf32, #tpu.memory_space<vmem>>, vector<1x1x1x2x8x8xf32>
    %683 = vector.shape_cast %682 : vector<1x1x1x2x8x8xf32> to vector<2x8x8xf32>
    %c16 = arith.constant 16 : index
    %684 = memref.load %arg0[%c16] : memref<180xf32, #tpu.memory_space<smem>>
    %685 = vector.broadcast %684 : f32 to vector<2x8x8xf32>
    %686 = arith.mulf %685, %683 : vector<2x8x8xf32>
    %687 = arith.addf %645, %686 : vector<2x8x8xf32>
    %c34 = arith.constant 34 : index
    %688 = memref.load %arg0[%c34] : memref<180xf32, #tpu.memory_space<smem>>
    %689 = vector.broadcast %688 : f32 to vector<2x8x8xf32>
    %690 = arith.mulf %689, %683 : vector<2x8x8xf32>
    %691 = arith.addf %649, %690 : vector<2x8x8xf32>
    %c52 = arith.constant 52 : index
    %692 = memref.load %arg0[%c52] : memref<180xf32, #tpu.memory_space<smem>>
    %693 = vector.broadcast %692 : f32 to vector<2x8x8xf32>
    %694 = arith.mulf %693, %683 : vector<2x8x8xf32>
    %695 = arith.addf %653, %694 : vector<2x8x8xf32>
    %c70 = arith.constant 70 : index
    %696 = memref.load %arg0[%c70] : memref<180xf32, #tpu.memory_space<smem>>
    %697 = vector.broadcast %696 : f32 to vector<2x8x8xf32>
    %698 = arith.mulf %697, %683 : vector<2x8x8xf32>
    %699 = arith.addf %657, %698 : vector<2x8x8xf32>
    %c88 = arith.constant 88 : index
    %700 = memref.load %arg0[%c88] : memref<180xf32, #tpu.memory_space<smem>>
    %701 = vector.broadcast %700 : f32 to vector<2x8x8xf32>
    %702 = arith.mulf %701, %683 : vector<2x8x8xf32>
    %703 = arith.addf %661, %702 : vector<2x8x8xf32>
    %c106 = arith.constant 106 : index
    %704 = memref.load %arg0[%c106] : memref<180xf32, #tpu.memory_space<smem>>
    %705 = vector.broadcast %704 : f32 to vector<2x8x8xf32>
    %706 = arith.mulf %705, %683 : vector<2x8x8xf32>
    %707 = arith.addf %665, %706 : vector<2x8x8xf32>
    %c124 = arith.constant 124 : index
    %708 = memref.load %arg0[%c124] : memref<180xf32, #tpu.memory_space<smem>>
    %709 = vector.broadcast %708 : f32 to vector<2x8x8xf32>
    %710 = arith.mulf %709, %683 : vector<2x8x8xf32>
    %711 = arith.addf %669, %710 : vector<2x8x8xf32>
    %c142 = arith.constant 142 : index
    %712 = memref.load %arg0[%c142] : memref<180xf32, #tpu.memory_space<smem>>
    %713 = vector.broadcast %712 : f32 to vector<2x8x8xf32>
    %714 = arith.mulf %713, %683 : vector<2x8x8xf32>
    %715 = arith.addf %673, %714 : vector<2x8x8xf32>
    %c160 = arith.constant 160 : index
    %716 = memref.load %arg0[%c160] : memref<180xf32, #tpu.memory_space<smem>>
    %717 = vector.broadcast %716 : f32 to vector<2x8x8xf32>
    %718 = arith.mulf %717, %683 : vector<2x8x8xf32>
    %719 = arith.addf %677, %718 : vector<2x8x8xf32>
    %c178 = arith.constant 178 : index
    %720 = memref.load %arg0[%c178] : memref<180xf32, #tpu.memory_space<smem>>
    %721 = vector.broadcast %720 : f32 to vector<2x8x8xf32>
    %722 = arith.mulf %721, %683 : vector<2x8x8xf32>
    %723 = arith.addf %681, %722 : vector<2x8x8xf32>
    %c0_111 = arith.constant 0 : index
    %c0_112 = arith.constant 0 : index
    %c1_113 = arith.constant 1 : index
    %c0_114 = arith.constant 0 : index
    %c3_115 = arith.constant 3 : index
    %c3_116 = arith.constant 3 : index
    %724 = vector.load %arg1[%c0_111, %c0_112, %c1_113, %c0_114, %c3_115, %c3_116] : memref<2x2x2x2x11x11xf32, #tpu.memory_space<vmem>>, vector<1x1x1x2x8x8xf32>
    %725 = vector.shape_cast %724 : vector<1x1x1x2x8x8xf32> to vector<2x8x8xf32>
    %c17 = arith.constant 17 : index
    %726 = memref.load %arg0[%c17] : memref<180xf32, #tpu.memory_space<smem>>
    %727 = vector.broadcast %726 : f32 to vector<2x8x8xf32>
    %728 = arith.mulf %727, %725 : vector<2x8x8xf32>
    %729 = arith.addf %687, %728 : vector<2x8x8xf32>
    %c35 = arith.constant 35 : index
    %730 = memref.load %arg0[%c35] : memref<180xf32, #tpu.memory_space<smem>>
    %731 = vector.broadcast %730 : f32 to vector<2x8x8xf32>
    %732 = arith.mulf %731, %725 : vector<2x8x8xf32>
    %733 = arith.addf %691, %732 : vector<2x8x8xf32>
    %c53 = arith.constant 53 : index
    %734 = memref.load %arg0[%c53] : memref<180xf32, #tpu.memory_space<smem>>
    %735 = vector.broadcast %734 : f32 to vector<2x8x8xf32>
    %736 = arith.mulf %735, %725 : vector<2x8x8xf32>
    %737 = arith.addf %695, %736 : vector<2x8x8xf32>
    %c71 = arith.constant 71 : index
    %738 = memref.load %arg0[%c71] : memref<180xf32, #tpu.memory_space<smem>>
    %739 = vector.broadcast %738 : f32 to vector<2x8x8xf32>
    %740 = arith.mulf %739, %725 : vector<2x8x8xf32>
    %741 = arith.addf %699, %740 : vector<2x8x8xf32>
    %c89 = arith.constant 89 : index
    %742 = memref.load %arg0[%c89] : memref<180xf32, #tpu.memory_space<smem>>
    %743 = vector.broadcast %742 : f32 to vector<2x8x8xf32>
    %744 = arith.mulf %743, %725 : vector<2x8x8xf32>
    %745 = arith.addf %703, %744 : vector<2x8x8xf32>
    %c107 = arith.constant 107 : index
    %746 = memref.load %arg0[%c107] : memref<180xf32, #tpu.memory_space<smem>>
    %747 = vector.broadcast %746 : f32 to vector<2x8x8xf32>
    %748 = arith.mulf %747, %725 : vector<2x8x8xf32>
    %749 = arith.addf %707, %748 : vector<2x8x8xf32>
    %c125 = arith.constant 125 : index
    %750 = memref.load %arg0[%c125] : memref<180xf32, #tpu.memory_space<smem>>
    %751 = vector.broadcast %750 : f32 to vector<2x8x8xf32>
    %752 = arith.mulf %751, %725 : vector<2x8x8xf32>
    %753 = arith.addf %711, %752 : vector<2x8x8xf32>
    %c143 = arith.constant 143 : index
    %754 = memref.load %arg0[%c143] : memref<180xf32, #tpu.memory_space<smem>>
    %755 = vector.broadcast %754 : f32 to vector<2x8x8xf32>
    %756 = arith.mulf %755, %725 : vector<2x8x8xf32>
    %757 = arith.addf %715, %756 : vector<2x8x8xf32>
    %c161 = arith.constant 161 : index
    %758 = memref.load %arg0[%c161] : memref<180xf32, #tpu.memory_space<smem>>
    %759 = vector.broadcast %758 : f32 to vector<2x8x8xf32>
    %760 = arith.mulf %759, %725 : vector<2x8x8xf32>
    %761 = arith.addf %719, %760 : vector<2x8x8xf32>
    %c179 = arith.constant 179 : index
    %762 = memref.load %arg0[%c179] : memref<180xf32, #tpu.memory_space<smem>>
    %763 = vector.broadcast %762 : f32 to vector<2x8x8xf32>
    %764 = arith.mulf %763, %725 : vector<2x8x8xf32>
    %765 = arith.addf %723, %764 : vector<2x8x8xf32>
    %c0_117 = arith.constant 0 : index
    %c0_118 = arith.constant 0 : index
    %c0_119 = arith.constant 0 : index
    %c0_120 = arith.constant 0 : index
    %766 = vector.load %arg2[%c0_117, %c0_118, %c0_119, %c0_120] : memref<10x2x8x8xf32, #tpu.memory_space<vmem>>, vector<1x2x8x8xf32>
    %767 = vector.shape_cast %766 : vector<1x2x8x8xf32> to vector<2x8x8xf32>
    %768 = vector.shape_cast %729 : vector<2x8x8xf32> to vector<1x2x8x8xf32>
    tpu.vector_store %arg2[%c0_117, %c0_118, %c0_119, %c0_120], %768 {strides = array<i32>} : memref<10x2x8x8xf32, #tpu.memory_space<vmem>>, vector<1x2x8x8xf32>,
    %c1_121 = arith.constant 1 : index
    %c0_122 = arith.constant 0 : index
    %c0_123 = arith.constant 0 : index
    %c0_124 = arith.constant 0 : index
    %769 = vector.load %arg2[%c1_121, %c0_122, %c0_123, %c0_124] : memref<10x2x8x8xf32, #tpu.memory_space<vmem>>, vector<1x2x8x8xf32>
    %770 = vector.shape_cast %769 : vector<1x2x8x8xf32> to vector<2x8x8xf32>
    %771 = vector.shape_cast %733 : vector<2x8x8xf32> to vector<1x2x8x8xf32>
    tpu.vector_store %arg2[%c1_121, %c0_122, %c0_123, %c0_124], %771 {strides = array<i32>} : memref<10x2x8x8xf32, #tpu.memory_space<vmem>>, vector<1x2x8x8xf32>,
    %c2_125 = arith.constant 2 : index
    %c0_126 = arith.constant 0 : index
    %c0_127 = arith.constant 0 : index
    %c0_128 = arith.constant 0 : index
    %772 = vector.load %arg2[%c2_125, %c0_126, %c0_127, %c0_128] : memref<10x2x8x8xf32, #tpu.memory_space<vmem>>, vector<1x2x8x8xf32>
    %773 = vector.shape_cast %772 : vector<1x2x8x8xf32> to vector<2x8x8xf32>
    %774 = vector.shape_cast %737 : vector<2x8x8xf32> to vector<1x2x8x8xf32>
    tpu.vector_store %arg2[%c2_125, %c0_126, %c0_127, %c0_128], %774 {strides = array<i32>} : memref<10x2x8x8xf32, #tpu.memory_space<vmem>>, vector<1x2x8x8xf32>,
    %c3_129 = arith.constant 3 : index
    %c0_130 = arith.constant 0 : index
    %c0_131 = arith.constant 0 : index
    %c0_132 = arith.constant 0 : index
    %775 = vector.load %arg2[%c3_129, %c0_130, %c0_131, %c0_132] : memref<10x2x8x8xf32, #tpu.memory_space<vmem>>, vector<1x2x8x8xf32>
    %776 = vector.shape_cast %775 : vector<1x2x8x8xf32> to vector<2x8x8xf32>
    %777 = vector.shape_cast %741 : vector<2x8x8xf32> to vector<1x2x8x8xf32>
    tpu.vector_store %arg2[%c3_129, %c0_130, %c0_131, %c0_132], %777 {strides = array<i32>} : memref<10x2x8x8xf32, #tpu.memory_space<vmem>>, vector<1x2x8x8xf32>,
    %c4_133 = arith.constant 4 : index
    %c0_134 = arith.constant 0 : index
    %c0_135 = arith.constant 0 : index
    %c0_136 = arith.constant 0 : index
    %778 = vector.load %arg2[%c4_133, %c0_134, %c0_135, %c0_136] : memref<10x2x8x8xf32, #tpu.memory_space<vmem>>, vector<1x2x8x8xf32>
    %779 = vector.shape_cast %778 : vector<1x2x8x8xf32> to vector<2x8x8xf32>
    %780 = vector.shape_cast %745 : vector<2x8x8xf32> to vector<1x2x8x8xf32>
    tpu.vector_store %arg2[%c4_133, %c0_134, %c0_135, %c0_136], %780 {strides = array<i32>} : memref<10x2x8x8xf32, #tpu.memory_space<vmem>>, vector<1x2x8x8xf32>,
    %c5_137 = arith.constant 5 : index
    %c0_138 = arith.constant 0 : index
    %c0_139 = arith.constant 0 : index
    %c0_140 = arith.constant 0 : index
    %781 = vector.load %arg2[%c5_137, %c0_138, %c0_139, %c0_140] : memref<10x2x8x8xf32, #tpu.memory_space<vmem>>, vector<1x2x8x8xf32>
    %782 = vector.shape_cast %781 : vector<1x2x8x8xf32> to vector<2x8x8xf32>
    %783 = vector.shape_cast %749 : vector<2x8x8xf32> to vector<1x2x8x8xf32>
    tpu.vector_store %arg2[%c5_137, %c0_138, %c0_139, %c0_140], %783 {strides = array<i32>} : memref<10x2x8x8xf32, #tpu.memory_space<vmem>>, vector<1x2x8x8xf32>,
    %c6_141 = arith.constant 6 : index
    %c0_142 = arith.constant 0 : index
    %c0_143 = arith.constant 0 : index
    %c0_144 = arith.constant 0 : index
    %784 = vector.load %arg2[%c6_141, %c0_142, %c0_143, %c0_144] : memref<10x2x8x8xf32, #tpu.memory_space<vmem>>, vector<1x2x8x8xf32>
    %785 = vector.shape_cast %784 : vector<1x2x8x8xf32> to vector<2x8x8xf32>
    %786 = vector.shape_cast %753 : vector<2x8x8xf32> to vector<1x2x8x8xf32>
    tpu.vector_store %arg2[%c6_141, %c0_142, %c0_143, %c0_144], %786 {strides = array<i32>} : memref<10x2x8x8xf32, #tpu.memory_space<vmem>>, vector<1x2x8x8xf32>,
    %c7_145 = arith.constant 7 : index
    %c0_146 = arith.constant 0 : index
    %c0_147 = arith.constant 0 : index
    %c0_148 = arith.constant 0 : index
    %787 = vector.load %arg2[%c7_145, %c0_146, %c0_147, %c0_148] : memref<10x2x8x8xf32, #tpu.memory_space<vmem>>, vector<1x2x8x8xf32>
    %788 = vector.shape_cast %787 : vector<1x2x8x8xf32> to vector<2x8x8xf32>
    %789 = vector.shape_cast %757 : vector<2x8x8xf32> to vector<1x2x8x8xf32>
    tpu.vector_store %arg2[%c7_145, %c0_146, %c0_147, %c0_148], %789 {strides = array<i32>} : memref<10x2x8x8xf32, #tpu.memory_space<vmem>>, vector<1x2x8x8xf32>,
    %c8_149 = arith.constant 8 : index
    %c0_150 = arith.constant 0 : index
    %c0_151 = arith.constant 0 : index
    %c0_152 = arith.constant 0 : index
    %790 = vector.load %arg2[%c8_149, %c0_150, %c0_151, %c0_152] : memref<10x2x8x8xf32, #tpu.memory_space<vmem>>, vector<1x2x8x8xf32>
    %791 = vector.shape_cast %790 : vector<1x2x8x8xf32> to vector<2x8x8xf32>
    %792 = vector.shape_cast %761 : vector<2x8x8xf32> to vector<1x2x8x8xf32>
    tpu.vector_store %arg2[%c8_149, %c0_150, %c0_151, %c0_152], %792 {strides = array<i32>} : memref<10x2x8x8xf32, #tpu.memory_space<vmem>>, vector<1x2x8x8xf32>,
    %c9_153 = arith.constant 9 : index
    %c0_154 = arith.constant 0 : index
    %c0_155 = arith.constant 0 : index
    %c0_156 = arith.constant 0 : index
    %793 = vector.load %arg2[%c9_153, %c0_154, %c0_155, %c0_156] : memref<10x2x8x8xf32, #tpu.memory_space<vmem>>, vector<1x2x8x8xf32>
    %794 = vector.shape_cast %793 : vector<1x2x8x8xf32> to vector<2x8x8xf32>
    %795 = vector.shape_cast %765 : vector<2x8x8xf32> to vector<1x2x8x8xf32>
    tpu.vector_store %arg2[%c9_153, %c0_154, %c0_155, %c0_156], %795 {strides = array<i32>} : memref<10x2x8x8xf32, #tpu.memory_space<vmem>>, vector<1x2x8x8xf32>,
    return
  }
}

</mosaic_0001>

<llo_original>
// kernel: conv2d_pallas.1
$region0: #{conv2d_pallas.1}
  #allocation0 [shape = 'u32[]', space=smem, size = 0x4, offset = 0x4, fixed_abs, tag = 'smem constant byte address 0x4 - core index']
  #allocation1 [shape = 'u32[72,128]{1,0:T(1,128)}', space=vmem, size = 0x9000, scoped, tag = 'internal scratch']
  %s0 = inlined_call_operand.vmem [shape: f32[180], index: 0, kind: input, shape index: {}]
  %s1 = inlined_call_operand.vmem [shape: f32[2,2,2,2,11,11], index: 1, kind: input, shape index: {}]
  %s2 = inlined_call_operand.vmem [shape: f32[10,2,8,8], index: 2, kind: output, shape index: {}]
  %s3 = sld [smem:[#allocation0]]
  $region22: #{conv2d_pallas.1} parent=0
    _
  %s5 = ssub.s32 1, %s3
  %s6 = scalar_select 0, %s5, %s3
  $region1: #{conv2d_pallas.1} parent=0
    #allocation2 [shape = 'u8[1024]{0}', space=smem, size = 0x400, scoped, tag = 'input window, operand 0, single buffered']
    #allocation3 [shape = 's32[1]{0}', space=sflag, size = 0x4, scoped, tag = 'scoped memory for conv2d_pallas.1']
    %7 = vsyncpa [#allocation3], 0
    // Predicated region
    $region2: #{conv2d_pallas.1} parent=1 // pred_check
      _
    $region3: #{conv2d_pallas.1} parent=1 // pred_check_branch
      %9 = sbr.rel (0) target = $region5
    $region4: #{conv2d_pallas.1} parent=1 // pred_region
      %11 = vsyncadd [#allocation3], 0
      %s13 = sshll.u32 %s0, 4
      %s14 = int_to_ptr.vmem [resolvable:$true] %s13
      %16 = dma.vmem_to_smem %s14, 32, [#allocation2], [#allocation3]
    $region5: #{conv2d_pallas.1} parent=1 // pred_fallthru
      _
    // Predicated region
    $region6: #{conv2d_pallas.1} parent=1 // pred_check
      _
    $region7: #{conv2d_pallas.1} parent=1 // pred_check_branch
      %18 = sbr.rel (0) target = $region9
    $region8: #{conv2d_pallas.1} parent=1 // pred_region
      _
    $region9: #{conv2d_pallas.1} parent=1 // pred_fallthru
      _
    // Predicated region
    $region10: #{conv2d_pallas.1} parent=1 // pred_check
      _
    $region11: #{conv2d_pallas.1} parent=1 // pred_check_branch
      %20 = sbr.rel (0) target = $region13
    $region12: #{conv2d_pallas.1} parent=1 // pred_region
      %22 = dma.done [#allocation3], 32
    $region13: #{conv2d_pallas.1} parent=1 // pred_fallthru
      _
    %23 = sfence
    %v24 = vld [vmem:[%s1] sm:$0xff]
    %v25 = vld [vmem:[%s1 + $0x10] sm:$0xff]
    %s26 = sld [smem:[#allocation2]]
    %v27 = vstv %s26
    %v28 = vmul.f32 %v27, %v24
    %v29 = vmul.f32 %v27, %v25
    %v30 = vadd.f32 %v28, 0.0
    %v31 = vadd.f32 %v29, 0.0
    %s32 = sld [smem:[#allocation2 + $0x12]]
    %v33 = vstv %s32
    %v34 = vmul.f32 %v33, %v24
    %v35 = vmul.f32 %v33, %v25
    %v36 = vadd.f32 %v34, 0.0
    %v37 = vadd.f32 %v35, 0.0
    %s38 = sld [smem:[#allocation2 + $0x24]]
    %v39 = vstv %s38
    %v40 = vmul.f32 %v39, %v24
    %v41 = vmul.f32 %v39, %v25
    %v42 = vadd.f32 %v40, 0.0
    %v43 = vadd.f32 %v41, 0.0
    %s44 = sld [smem:[#allocation2 + $0x36]]
    %v45 = vstv %s44
    %v46 = vmul.f32 %v45, %v24
    %v47 = vmul.f32 %v45, %v25
    %v48 = vadd.f32 %v46, 0.0
    %v49 = vadd.f32 %v47, 0.0
    %s50 = sld [smem:[#allocation2 + $0x48]]
    %v51 = vstv %s50
    %v52 = vmul.f32 %v51, %v24
    %v53 = vmul.f32 %v51, %v25
    %v54 = vadd.f32 %v52, 0.0
    %v55 = vadd.f32 %v53, 0.0
    %s56 = sld [smem:[#allocation2 + $0x5a]]
    %v57 = vstv %s56
    %v58 = vmul.f32 %v57, %v24
    %v59 = vmul.f32 %v57, %v25
    %v60 = vadd.f32 %v58, 0.0
    %v61 = vadd.f32 %v59, 0.0
    %s62 = sld [smem:[#allocation2 + $0x6c]]
    %v63 = vstv %s62
    %v64 = vmul.f32 %v63, %v24
    %v65 = vmul.f32 %v63, %v25
    %v66 = vadd.f32 %v64, 0.0
    %v67 = vadd.f32 %v65, 0.0
    %s68 = sld [smem:[#allocation2 + $0x7e]]
    %v69 = vstv %s68
    %v70 = vmul.f32 %v69, %v24
    %v71 = vmul.f32 %v69, %v25
    %v72 = vadd.f32 %v70, 0.0
    %v73 = vadd.f32 %v71, 0.0
    %s74 = sld [smem:[#allocation2 + $0x90]]
    %v75 = vstv %s74
    %v76 = vmul.f32 %v75, %v24
    %v77 = vmul.f32 %v75, %v25
    %v78 = vadd.f32 %v76, 0.0
    %v79 = vadd.f32 %v77, 0.0
    %s80 = sld [smem:[#allocation2 + $0xa2]]
    %v81 = vstv %s80
    %v82 = vmul.f32 %v81, %v24
    %v83 = vmul.f32 %v81, %v25
    %v84 = vadd.f32 %v82, 0.0
    %v85 = vadd.f32 %v83, 0.0
    %s86 = scalar_lea.vmem %s1, 64
    %v87 = vld [vmem:[%s86] sm:$0xff]
    %v88 = vld [vmem:[%s86 + $0x10] sm:$0xff]
    %s89 = sld [smem:[#allocation2 + $0x1]]
    %v90 = vstv %s89
    %v91 = vmul.f32 %v90, %v87
    %v92 = vmul.f32 %v90, %v88
    %95 = vrot.lane.b32.xlu0 %v91, 127
    %v96 = vpop.permute.xlu0 %95
    %97 = vrot.lane.b32.xlu0 %v92, 127
    %v98 = vpop.permute.xlu0 %97
    %v101 = vadd.f32 %v30, %v96
    %v102 = vadd.f32 %v31, %v98
    %s103 = sld [smem:[#allocation2 + $0x13]]
    %v104 = vstv %s103
    %v105 = vmul.f32 %v104, %v87
    %v106 = vmul.f32 %v104, %v88
    %109 = vrot.lane.b32.xlu0 %v105, 127
    %v110 = vpop.permute.xlu0 %109
    %111 = vrot.lane.b32.xlu0 %v106, 127
    %v112 = vpop.permute.xlu0 %111
    %v115 = vadd.f32 %v36, %v110
    %v116 = vadd.f32 %v37, %v112
    %s117 = sld [smem:[#allocation2 + $0x25]]
    %v118 = vstv %s117
    %v119 = vmul.f32 %v118, %v87
    %v120 = vmul.f32 %v118, %v88
    %123 = vrot.lane.b32.xlu0 %v119, 127
    %v124 = vpop.permute.xlu0 %123
    %125 = vrot.lane.b32.xlu0 %v120, 127
    %v126 = vpop.permute.xlu0 %125
    %v129 = vadd.f32 %v42, %v124
    %v130 = vadd.f32 %v43, %v126
    %s131 = sld [smem:[#allocation2 + $0x37]]
    %v132 = vstv %s131
    %v133 = vmul.f32 %v132, %v87
    %v134 = vmul.f32 %v132, %v88
    %137 = vrot.lane.b32.xlu0 %v133, 127
    %v138 = vpop.permute.xlu0 %137
    %139 = vrot.lane.b32.xlu0 %v134, 127
    %v140 = vpop.permute.xlu0 %139
    %v143 = vadd.f32 %v48, %v138
    %v144 = vadd.f32 %v49, %v140
    %s145 = sld [smem:[#allocation2 + $0x49]]
    %v146 = vstv %s145
    %v147 = vmul.f32 %v146, %v87
    %v148 = vmul.f32 %v146, %v88
    %151 = vrot.lane.b32.xlu0 %v147, 127
    %v152 = vpop.permute.xlu0 %151
    %153 = vrot.lane.b32.xlu0 %v148, 127
    %v154 = vpop.permute.xlu0 %153
    %v157 = vadd.f32 %v54, %v152
    %v158 = vadd.f32 %v55, %v154
    %s159 = sld [smem:[#allocation2 + $0x5b]]
    %v160 = vstv %s159
    %v161 = vmul.f32 %v160, %v87
    %v162 = vmul.f32 %v160, %v88
    %165 = vrot.lane.b32.xlu0 %v161, 127
    %v166 = vpop.permute.xlu0 %165
    %167 = vrot.lane.b32.xlu0 %v162, 127
    %v168 = vpop.permute.xlu0 %167
    %v171 = vadd.f32 %v60, %v166
    %v172 = vadd.f32 %v61, %v168
    %s173 = sld [smem:[#allocation2 + $0x6d]]
    %v174 = vstv %s173
    %v175 = vmul.f32 %v174, %v87
    %v176 = vmul.f32 %v174, %v88
    %179 = vrot.lane.b32.xlu0 %v175, 127
    %v180 = vpop.permute.xlu0 %179
    %181 = vrot.lane.b32.xlu0 %v176, 127
    %v182 = vpop.permute.xlu0 %181
    %v185 = vadd.f32 %v66, %v180
    %v186 = vadd.f32 %v67, %v182
    %s187 = sld [smem:[#allocation2 + $0x7f]]
    %v188 = vstv %s187
    %v189 = vmul.f32 %v188, %v87
    %v190 = vmul.f32 %v188, %v88
    %193 = vrot.lane.b32.xlu0 %v189, 127
    %v194 = vpop.permute.xlu0 %193
    %195 = vrot.lane.b32.xlu0 %v190, 127
    %v196 = vpop.permute.xlu0 %195
    %v199 = vadd.f32 %v72, %v194
    %v200 = vadd.f32 %v73, %v196
    %s201 = sld [smem:[#allocation2 + $0x91]]
    %v202 = vstv %s201
    %v203 = vmul.f32 %v202, %v87
    %v204 = vmul.f32 %v202, %v88
    %207 = vrot.lane.b32.xlu0 %v203, 127
    %v208 = vpop.permute.xlu0 %207
    %209 = vrot.lane.b32.xlu0 %v204, 127
    %v210 = vpop.permute.xlu0 %209
    %v213 = vadd.f32 %v78, %v208
    %v214 = vadd.f32 %v79, %v210
    %s215 = sld [smem:[#allocation2 + $0xa3]]
    %v216 = vstv %s215
    %v217 = vmul.f32 %v216, %v87
    %v218 = vmul.f32 %v216, %v88
    %221 = vrot.lane.b32.xlu0 %v217, 127
    %v222 = vpop.permute.xlu0 %221
    %223 = vrot.lane.b32.xlu0 %v218, 127
    %v224 = vpop.permute.xlu0 %223
    %v227 = vadd.f32 %v84, %v222
    %v228 = vadd.f32 %v85, %v224
    %s229 = sld [smem:[#allocation2 + $0x2]]
    %v230 = vstv %s229
    %v231 = vmul.f32 %v230, %v24
    %v232 = vmul.f32 %v230, %v25
    %235 = vrot.lane.b32.xlu0 %v231, 125
    %v236 = vpop.permute.xlu0 %235
    %237 = vrot.lane.b32.xlu0 %v232, 125
    %v238 = vpop.permute.xlu0 %237
    %v241 = vadd.f32 %v101, %v236
    %v242 = vadd.f32 %v102, %v238
    %s243 = sld [smem:[#allocation2 + $0x14]]
    %v244 = vstv %s243
    %v245 = vmul.f32 %v244, %v24
    %v246 = vmul.f32 %v244, %v25
    %249 = vrot.lane.b32.xlu0 %v245, 125
    %v250 = vpop.permute.xlu0 %249
    %251 = vrot.lane.b32.xlu0 %v246, 125
    %v252 = vpop.permute.xlu0 %251
    %v255 = vadd.f32 %v115, %v250
    %v256 = vadd.f32 %v116, %v252
    %s257 = sld [smem:[#allocation2 + $0x26]]
    %v258 = vstv %s257
    %v259 = vmul.f32 %v258, %v24
    %v260 = vmul.f32 %v258, %v25
    %263 = vrot.lane.b32.xlu0 %v259, 125
    %v264 = vpop.permute.xlu0 %263
    %265 = vrot.lane.b32.xlu0 %v260, 125
    %v266 = vpop.permute.xlu0 %265
    %v269 = vadd.f32 %v129, %v264
    %v270 = vadd.f32 %v130, %v266
    %s271 = sld [smem:[#allocation2 + $0x38]]
    %v272 = vstv %s271
    %v273 = vmul.f32 %v272, %v24
    %v274 = vmul.f32 %v272, %v25
    %277 = vrot.lane.b32.xlu0 %v273, 125
    %v278 = vpop.permute.xlu0 %277
    %279 = vrot.lane.b32.xlu0 %v274, 125
    %v280 = vpop.permute.xlu0 %279
    %v283 = vadd.f32 %v143, %v278
    %v284 = vadd.f32 %v144, %v280
    %s285 = sld [smem:[#allocation2 + $0x4a]]
    %v286 = vstv %s285
    %v287 = vmul.f32 %v286, %v24
    %v288 = vmul.f32 %v286, %v25
    %291 = vrot.lane.b32.xlu0 %v287, 125
    %v292 = vpop.permute.xlu0 %291
    %293 = vrot.lane.b32.xlu0 %v288, 125
    %v294 = vpop.permute.xlu0 %293
    %v297 = vadd.f32 %v157, %v292
    %v298 = vadd.f32 %v158, %v294
    %s299 = sld [smem:[#allocation2 + $0x5c]]
    %v300 = vstv %s299
    %v301 = vmul.f32 %v300, %v24
    %v302 = vmul.f32 %v300, %v25
    %305 = vrot.lane.b32.xlu0 %v301, 125
    %v306 = vpop.permute.xlu0 %305
    %307 = vrot.lane.b32.xlu0 %v302, 125
    %v308 = vpop.permute.xlu0 %307
    %v311 = vadd.f32 %v171, %v306
    %v312 = vadd.f32 %v172, %v308
    %s313 = sld [smem:[#allocation2 + $0x6e]]
    %v314 = vstv %s313
    %v315 = vmul.f32 %v314, %v24
    %v316 = vmul.f32 %v314, %v25
    %319 = vrot.lane.b32.xlu0 %v315, 125
    %v320 = vpop.permute.xlu0 %319
    %321 = vrot.lane.b32.xlu0 %v316, 125
    %v322 = vpop.permute.xlu0 %321
    %v325 = vadd.f32 %v185, %v320
    %v326 = vadd.f32 %v186, %v322
    %s327 = sld [smem:[#allocation2 + $0x80]]
    %v328 = vstv %s327
    %v329 = vmul.f32 %v328, %v24
    %v330 = vmul.f32 %v328, %v25
    %333 = vrot.lane.b32.xlu0 %v329, 125
    %v334 = vpop.permute.xlu0 %333
    %335 = vrot.lane.b32.xlu0 %v330, 125
    %v336 = vpop.permute.xlu0 %335
    %v339 = vadd.f32 %v199, %v334
    %v340 = vadd.f32 %v200, %v336
    %s341 = sld [smem:[#allocation2 + $0x92]]
    %v342 = vstv %s341
    %v343 = vmul.f32 %v342, %v24
    %v344 = vmul.f32 %v342, %v25
    %347 = vrot.lane.b32.xlu0 %v343, 125
    %v348 = vpop.permute.xlu0 %347
    %349 = vrot.lane.b32.xlu0 %v344, 125
    %v350 = vpop.permute.xlu0 %349
    %v353 = vadd.f32 %v213, %v348
    %v354 = vadd.f32 %v214, %v350
    %s355 = sld [smem:[#allocation2 + $0xa4]]
    %v356 = vstv %s355
    %v357 = vmul.f32 %v356, %v24
    %v358 = vmul.f32 %v356, %v25
    %361 = vrot.lane.b32.xlu0 %v357, 125
    %v362 = vpop.permute.xlu0 %361
    %363 = vrot.lane.b32.xlu0 %v358, 125
    %v364 = vpop.permute.xlu0 %363
    %v367 = vadd.f32 %v227, %v362
    %v368 = vadd.f32 %v228, %v364
    %s369 = scalar_lea.vmem %s1, 128
    %v370 = vld [vmem:[%s369 + $0x1] sm:$0xff]
    %v371 = vld [vmem:[%s369 + $0x11] sm:$0xff]
    %s372 = sld [smem:[#allocation2 + $0x3]]
    %v373 = vstv %s372
    %v374 = vmul.f32 %v373, %v370
    %v375 = vmul.f32 %v373, %v371
    %v376 = vadd.f32 %v241, %v374
    %v377 = vadd.f32 %v242, %v375
    %s378 = sld [smem:[#allocation2 + $0x15]]
    %v379 = vstv %s378
    %v380 = vmul.f32 %v379, %v370
    %v381 = vmul.f32 %v379, %v371
    %v382 = vadd.f32 %v255, %v380
    %v383 = vadd.f32 %v256, %v381
    %s384 = sld [smem:[#allocation2 + $0x27]]
    %v385 = vstv %s384
    %v386 = vmul.f32 %v385, %v370
    %v387 = vmul.f32 %v385, %v371
    %v388 = vadd.f32 %v269, %v386
    %v389 = vadd.f32 %v270, %v387
    %s390 = sld [smem:[#allocation2 + $0x39]]
    %v391 = vstv %s390
    %v392 = vmul.f32 %v391, %v370
    %v393 = vmul.f32 %v391, %v371
    %v394 = vadd.f32 %v283, %v392
    %v395 = vadd.f32 %v284, %v393
    %s396 = sld [smem:[#allocation2 + $0x4b]]
    %v397 = vstv %s396
    %v398 = vmul.f32 %v397, %v370
    %v399 = vmul.f32 %v397, %v371
    %v400 = vadd.f32 %v297, %v398
    %v401 = vadd.f32 %v298, %v399
    %s402 = sld [smem:[#allocation2 + $0x5d]]
    %v403 = vstv %s402
    %v404 = vmul.f32 %v403, %v370
    %v405 = vmul.f32 %v403, %v371
    %v406 = vadd.f32 %v311, %v404
    %v407 = vadd.f32 %v312, %v405
    %s408 = sld [smem:[#allocation2 + $0x6f]]
    %v409 = vstv %s408
    %v410 = vmul.f32 %v409, %v370
    %v411 = vmul.f32 %v409, %v371
    %v412 = vadd.f32 %v325, %v410
    %v413 = vadd.f32 %v326, %v411
    %s414 = sld [smem:[#allocation2 + $0x81]]
    %v415 = vstv %s414
    %v416 = vmul.f32 %v415, %v370
    %v417 = vmul.f32 %v415, %v371
    %v418 = vadd.f32 %v339, %v416
    %v419 = vadd.f32 %v340, %v417
    %s420 = sld [smem:[#allocation2 + $0x93]]
    %v421 = vstv %s420
    %v422 = vmul.f32 %v421, %v370
    %v423 = vmul.f32 %v421, %v371
    %v424 = vadd.f32 %v353, %v422
    %v425 = vadd.f32 %v354, %v423
    %s426 = sld [smem:[#allocation2 + $0xa5]]
    %v427 = vstv %s426
    %v428 = vmul.f32 %v427, %v370
    %v429 = vmul.f32 %v427, %v371
    %v430 = vadd.f32 %v367, %v428
    %v431 = vadd.f32 %v368, %v429
    %s432 = scalar_lea.vmem %s1, 192
    %v433 = vld [vmem:[%s432 + $0x1] sm:$0xff]
    %v434 = vld [vmem:[%s432 + $0x11] sm:$0xff]
    %s435 = sld [smem:[#allocation2 + $0x4]]
    %v436 = vstv %s435
    %v437 = vmul.f32 %v436, %v433
    %v438 = vmul.f32 %v436, %v434
    %441 = vrot.lane.b32.xlu0 %v437, 127
    %v442 = vpop.permute.xlu0 %441
    %443 = vrot.lane.b32.xlu0 %v438, 127
    %v444 = vpop.permute.xlu0 %443
    %v447 = vadd.f32 %v376, %v442
    %v448 = vadd.f32 %v377, %v444
    %s449 = sld [smem:[#allocation2 + $0x16]]
    %v450 = vstv %s449
    %v451 = vmul.f32 %v450, %v433
    %v452 = vmul.f32 %v450, %v434
    %455 = vrot.lane.b32.xlu0 %v451, 127
    %v456 = vpop.permute.xlu0 %455
    %457 = vrot.lane.b32.xlu0 %v452, 127
    %v458 = vpop.permute.xlu0 %457
    %v461 = vadd.f32 %v382, %v456
    %v462 = vadd.f32 %v383, %v458
    %s463 = sld [smem:[#allocation2 + $0x28]]
    %v464 = vstv %s463
    %v465 = vmul.f32 %v464, %v433
    %v466 = vmul.f32 %v464, %v434
    %469 = vrot.lane.b32.xlu0 %v465, 127
    %v470 = vpop.permute.xlu0 %469
    %471 = vrot.lane.b32.xlu0 %v466, 127
    %v472 = vpop.permute.xlu0 %471
    %v475 = vadd.f32 %v388, %v470
    %v476 = vadd.f32 %v389, %v472
    %s477 = sld [smem:[#allocation2 + $0x3a]]
    %v478 = vstv %s477
    %v479 = vmul.f32 %v478, %v433
    %v480 = vmul.f32 %v478, %v434
    %483 = vrot.lane.b32.xlu0 %v479, 127
    %v484 = vpop.permute.xlu0 %483
    %485 = vrot.lane.b32.xlu0 %v480, 127
    %v486 = vpop.permute.xlu0 %485
    %v489 = vadd.f32 %v394, %v484
    %v490 = vadd.f32 %v395, %v486
    %s491 = sld [smem:[#allocation2 + $0x4c]]
    %v492 = vstv %s491
    %v493 = vmul.f32 %v492, %v433
    %v494 = vmul.f32 %v492, %v434
    %497 = vrot.lane.b32.xlu0 %v493, 127
    %v498 = vpop.permute.xlu0 %497
    %499 = vrot.lane.b32.xlu0 %v494, 127
    %v500 = vpop.permute.xlu0 %499
    %v503 = vadd.f32 %v400, %v498
    %v504 = vadd.f32 %v401, %v500
    %s505 = sld [smem:[#allocation2 + $0x5e]]
    %v506 = vstv %s505
    %v507 = vmul.f32 %v506, %v433
    %v508 = vmul.f32 %v506, %v434
    %511 = vrot.lane.b32.xlu0 %v507, 127
    %v512 = vpop.permute.xlu0 %511
    %513 = vrot.lane.b32.xlu0 %v508, 127
    %v514 = vpop.permute.xlu0 %513
    %v517 = vadd.f32 %v406, %v512
    %v518 = vadd.f32 %v407, %v514
    %s519 = sld [smem:[#allocation2 + $0x70]]
    %v520 = vstv %s519
    %v521 = vmul.f32 %v520, %v433
    %v522 = vmul.f32 %v520, %v434
    %525 = vrot.lane.b32.xlu0 %v521, 127
    %v526 = vpop.permute.xlu0 %525
    %527 = vrot.lane.b32.xlu0 %v522, 127
    %v528 = vpop.permute.xlu0 %527
    %v531 = vadd.f32 %v412, %v526
    %v532 = vadd.f32 %v413, %v528
    %s533 = sld [smem:[#allocation2 + $0x82]]
    %v534 = vstv %s533
    %v535 = vmul.f32 %v534, %v433
    %v536 = vmul.f32 %v534, %v434
    %539 = vrot.lane.b32.xlu0 %v535, 127
    %v540 = vpop.permute.xlu0 %539
    %541 = vrot.lane.b32.xlu0 %v536, 127
    %v542 = vpop.permute.xlu0 %541
    %v545 = vadd.f32 %v418, %v540
    %v546 = vadd.f32 %v419, %v542
    %s547 = sld [smem:[#allocation2 + $0x94]]
    %v548 = vstv %s547
    %v549 = vmul.f32 %v548, %v433
    %v550 = vmul.f32 %v548, %v434
    %553 = vrot.lane.b32.xlu0 %v549, 127
    %v554 = vpop.permute.xlu0 %553
    %555 = vrot.lane.b32.xlu0 %v550, 127
    %v556 = vpop.permute.xlu0 %555
    %v559 = vadd.f32 %v424, %v554
    %v560 = vadd.f32 %v425, %v556
    %s561 = sld [smem:[#allocation2 + $0xa6]]
    %v562 = vstv %s561
    %v563 = vmul.f32 %v562, %v433
    %v564 = vmul.f32 %v562, %v434
    %567 = vrot.lane.b32.xlu0 %v563, 127
    %v568 = vpop.permute.xlu0 %567
    %569 = vrot.lane.b32.xlu0 %v564, 127
    %v570 = vpop.permute.xlu0 %569
    %v573 = vadd.f32 %v430, %v568
    %v574 = vadd.f32 %v431, %v570
    %s575 = sld [smem:[#allocation2 + $0x5]]
    %v576 = vstv %s575
    %v577 = vmul.f32 %v576, %v370
    %v578 = vmul.f32 %v576, %v371
    %581 = vrot.lane.b32.xlu0 %v577, 125
    %v582 = vpop.permute.xlu0 %581
    %583 = vrot.lane.b32.xlu0 %v578, 125
    %v584 = vpop.permute.xlu0 %583
    %v587 = vadd.f32 %v447, %v582
    %v588 = vadd.f32 %v448, %v584
    %s589 = sld [smem:[#allocation2 + $0x17]]
    %v590 = vstv %s589
    %v591 = vmul.f32 %v590, %v370
    %v592 = vmul.f32 %v590, %v371
    %595 = vrot.lane.b32.xlu0 %v591, 125
    %v596 = vpop.permute.xlu0 %595
    %597 = vrot.lane.b32.xlu0 %v592, 125
    %v598 = vpop.permute.xlu0 %597
    %v601 = vadd.f32 %v461, %v596
    %v602 = vadd.f32 %v462, %v598
    %s603 = sld [smem:[#allocation2 + $0x29]]
    %v604 = vstv %s603
    %v605 = vmul.f32 %v604, %v370
    %v606 = vmul.f32 %v604, %v371
    %609 = vrot.lane.b32.xlu0 %v605, 125
    %v610 = vpop.permute.xlu0 %609
    %611 = vrot.lane.b32.xlu0 %v606, 125
    %v612 = vpop.permute.xlu0 %611
    %v615 = vadd.f32 %v475, %v610
    %v616 = vadd.f32 %v476, %v612
    %s617 = sld [smem:[#allocation2 + $0x3b]]
    %v618 = vstv %s617
    %v619 = vmul.f32 %v618, %v370
    %v620 = vmul.f32 %v618, %v371
    %623 = vrot.lane.b32.xlu0 %v619, 125
    %v624 = vpop.permute.xlu0 %623
    %625 = vrot.lane.b32.xlu0 %v620, 125
    %v626 = vpop.permute.xlu0 %625
    %v629 = vadd.f32 %v489, %v624
    %v630 = vadd.f32 %v490, %v626
    %s631 = sld [smem:[#allocation2 + $0x4d]]
    %v632 = vstv %s631
    %v633 = vmul.f32 %v632, %v370
    %v634 = vmul.f32 %v632, %v371
    %637 = vrot.lane.b32.xlu0 %v633, 125
    %v638 = vpop.permute.xlu0 %637
    %639 = vrot.lane.b32.xlu0 %v634, 125
    %v640 = vpop.permute.xlu0 %639
    %v643 = vadd.f32 %v503, %v638
    %v644 = vadd.f32 %v504, %v640
    %s645 = sld [smem:[#allocation2 + $0x5f]]
    %v646 = vstv %s645
    %v647 = vmul.f32 %v646, %v370
    %v648 = vmul.f32 %v646, %v371
    %651 = vrot.lane.b32.xlu0 %v647, 125
    %v652 = vpop.permute.xlu0 %651
    %653 = vrot.lane.b32.xlu0 %v648, 125
    %v654 = vpop.permute.xlu0 %653
    %v657 = vadd.f32 %v517, %v652
    %v658 = vadd.f32 %v518, %v654
    %s659 = sld [smem:[#allocation2 + $0x71]]
    %v660 = vstv %s659
    %v661 = vmul.f32 %v660, %v370
    %v662 = vmul.f32 %v660, %v371
    %665 = vrot.lane.b32.xlu0 %v661, 125
    %v666 = vpop.permute.xlu0 %665
    %667 = vrot.lane.b32.xlu0 %v662, 125
    %v668 = vpop.permute.xlu0 %667
    %v671 = vadd.f32 %v531, %v666
    %v672 = vadd.f32 %v532, %v668
    %s673 = sld [smem:[#allocation2 + $0x83]]
    %v674 = vstv %s673
    %v675 = vmul.f32 %v674, %v370
    %v676 = vmul.f32 %v674, %v371
    %679 = vrot.lane.b32.xlu0 %v675, 125
    %v680 = vpop.permute.xlu0 %679
    %681 = vrot.lane.b32.xlu0 %v676, 125
    %v682 = vpop.permute.xlu0 %681
    %v685 = vadd.f32 %v545, %v680
    %v686 = vadd.f32 %v546, %v682
    %s687 = sld [smem:[#allocation2 + $0x95]]
    %v688 = vstv %s687
    %v689 = vmul.f32 %v688, %v370
    %v690 = vmul.f32 %v688, %v371
    %693 = vrot.lane.b32.xlu0 %v689, 125
    %v694 = vpop.permute.xlu0 %693
    %695 = vrot.lane.b32.xlu0 %v690, 125
    %v696 = vpop.permute.xlu0 %695
    %v699 = vadd.f32 %v559, %v694
    %v700 = vadd.f32 %v560, %v696
    %s701 = sld [smem:[#allocation2 + $0xa7]]
    %v702 = vstv %s701
    %v703 = vmul.f32 %v702, %v370
    %v704 = vmul.f32 %v702, %v371
    %707 = vrot.lane.b32.xlu0 %v703, 125
    %v708 = vpop.permute.xlu0 %707
    %709 = vrot.lane.b32.xlu0 %v704, 125
    %v710 = vpop.permute.xlu0 %709
    %v713 = vadd.f32 %v573, %v708
    %v714 = vadd.f32 %v574, %v710
    %v715 = vld [vmem:[%s1 + $0x3] sm:$0xff]
    %v716 = vld [vmem:[%s1 + $0x13] sm:$0xff]
    %s717 = sld [smem:[#allocation2 + $0x6]]
    %v718 = vstv %s717
    %v719 = vmul.f32 %v718, %v715
    %v720 = vmul.f32 %v718, %v716
    %v721 = vadd.f32 %v587, %v719
    %v722 = vadd.f32 %v588, %v720
    %s723 = sld [smem:[#allocation2 + $0x18]]
    %v724 = vstv %s723
    %v725 = vmul.f32 %v724, %v715
    %v726 = vmul.f32 %v724, %v716
    %v727 = vadd.f32 %v601, %v725
    %v728 = vadd.f32 %v602, %v726
    %s729 = sld [smem:[#allocation2 + $0x2a]]
    %v730 = vstv %s729
    %v731 = vmul.f32 %v730, %v715
    %v732 = vmul.f32 %v730, %v716
    %v733 = vadd.f32 %v615, %v731
    %v734 = vadd.f32 %v616, %v732
    %s735 = sld [smem:[#allocation2 + $0x3c]]
    %v736 = vstv %s735
    %v737 = vmul.f32 %v736, %v715
    %v738 = vmul.f32 %v736, %v716
    %v739 = vadd.f32 %v629, %v737
    %v740 = vadd.f32 %v630, %v738
    %s741 = sld [smem:[#allocation2 + $0x4e]]
    %v742 = vstv %s741
    %v743 = vmul.f32 %v742, %v715
    %v744 = vmul.f32 %v742, %v716
    %v745 = vadd.f32 %v643, %v743
    %v746 = vadd.f32 %v644, %v744
    %s747 = sld [smem:[#allocation2 + $0x60]]
    %v748 = vstv %s747
    %v749 = vmul.f32 %v748, %v715
    %v750 = vmul.f32 %v748, %v716
    %v751 = vadd.f32 %v657, %v749
    %v752 = vadd.f32 %v658, %v750
    %s753 = sld [smem:[#allocation2 + $0x72]]
    %v754 = vstv %s753
    %v755 = vmul.f32 %v754, %v715
    %v756 = vmul.f32 %v754, %v716
    %v757 = vadd.f32 %v671, %v755
    %v758 = vadd.f32 %v672, %v756
    %s759 = sld [smem:[#allocation2 + $0x84]]
    %v760 = vstv %s759
    %v761 = vmul.f32 %v760, %v715
    %v762 = vmul.f32 %v760, %v716
    %v763 = vadd.f32 %v685, %v761
    %v764 = vadd.f32 %v686, %v762
    %s765 = sld [smem:[#allocation2 + $0x96]]
    %v766 = vstv %s765
    %v767 = vmul.f32 %v766, %v715
    %v768 = vmul.f32 %v766, %v716
    %v769 = vadd.f32 %v699, %v767
    %v770 = vadd.f32 %v700, %v768
    %s771 = sld [smem:[#allocation2 + $0xa8]]
    %v772 = vstv %s771
    %v773 = vmul.f32 %v772, %v715
    %v774 = vmul.f32 %v772, %v716
    %v775 = vadd.f32 %v713, %v773
    %v776 = vadd.f32 %v714, %v774
    %v777 = vld [vmem:[%s86 + $0x3] sm:$0xff]
    %v778 = vld [vmem:[%s86 + $0x13] sm:$0xff]
    %s779 = sld [smem:[#allocation2 + $0x7]]
    %v780 = vstv %s779
    %v781 = vmul.f32 %v780, %v777
    %v782 = vmul.f32 %v780, %v778
    %785 = vrot.lane.b32.xlu0 %v781, 127
    %v786 = vpop.permute.xlu0 %785
    %787 = vrot.lane.b32.xlu0 %v782, 127
    %v788 = vpop.permute.xlu0 %787
    %v791 = vadd.f32 %v721, %v786
    %v792 = vadd.f32 %v722, %v788
    %s793 = sld [smem:[#allocation2 + $0x19]]
    %v794 = vstv %s793
    %v795 = vmul.f32 %v794, %v777
    %v796 = vmul.f32 %v794, %v778
    %799 = vrot.lane.b32.xlu0 %v795, 127
    %v800 = vpop.permute.xlu0 %799
    %801 = vrot.lane.b32.xlu0 %v796, 127
    %v802 = vpop.permute.xlu0 %801
    %v805 = vadd.f32 %v727, %v800
    %v806 = vadd.f32 %v728, %v802
    %s807 = sld [smem:[#allocation2 + $0x2b]]
    %v808 = vstv %s807
    %v809 = vmul.f32 %v808, %v777
    %v810 = vmul.f32 %v808, %v778
    %813 = vrot.lane.b32.xlu0 %v809, 127
    %v814 = vpop.permute.xlu0 %813
    %815 = vrot.lane.b32.xlu0 %v810, 127
    %v816 = vpop.permute.xlu0 %815
    %v819 = vadd.f32 %v733, %v814
    %v820 = vadd.f32 %v734, %v816
    %s821 = sld [smem:[#allocation2 + $0x3d]]
    %v822 = vstv %s821
    %v823 = vmul.f32 %v822, %v777
    %v824 = vmul.f32 %v822, %v778
    %827 = vrot.lane.b32.xlu0 %v823, 127
    %v828 = vpop.permute.xlu0 %827
    %829 = vrot.lane.b32.xlu0 %v824, 127
    %v830 = vpop.permute.xlu0 %829
    %v833 = vadd.f32 %v739, %v828
    %v834 = vadd.f32 %v740, %v830
    %s835 = sld [smem:[#allocation2 + $0x4f]]
    %v836 = vstv %s835
    %v837 = vmul.f32 %v836, %v777
    %v838 = vmul.f32 %v836, %v778
    %841 = vrot.lane.b32.xlu0 %v837, 127
    %v842 = vpop.permute.xlu0 %841
    %843 = vrot.lane.b32.xlu0 %v838, 127
    %v844 = vpop.permute.xlu0 %843
    %v847 = vadd.f32 %v745, %v842
    %v848 = vadd.f32 %v746, %v844
    %s849 = sld [smem:[#allocation2 + $0x61]]
    %v850 = vstv %s849
    %v851 = vmul.f32 %v850, %v777
    %v852 = vmul.f32 %v850, %v778
    %855 = vrot.lane.b32.xlu0 %v851, 127
    %v856 = vpop.permute.xlu0 %855
    %857 = vrot.lane.b32.xlu0 %v852, 127
    %v858 = vpop.permute.xlu0 %857
    %v861 = vadd.f32 %v751, %v856
    %v862 = vadd.f32 %v752, %v858
    %s863 = sld [smem:[#allocation2 + $0x73]]
    %v864 = vstv %s863
    %v865 = vmul.f32 %v864, %v777
    %v866 = vmul.f32 %v864, %v778
    %869 = vrot.lane.b32.xlu0 %v865, 127
    %v870 = vpop.permute.xlu0 %869
    %871 = vrot.lane.b32.xlu0 %v866, 127
    %v872 = vpop.permute.xlu0 %871
    %v875 = vadd.f32 %v757, %v870
    %v876 = vadd.f32 %v758, %v872
    %s877 = sld [smem:[#allocation2 + $0x85]]
    %v878 = vstv %s877
    %v879 = vmul.f32 %v878, %v777
    %v880 = vmul.f32 %v878, %v778
    %883 = vrot.lane.b32.xlu0 %v879, 127
    %v884 = vpop.permute.xlu0 %883
    %885 = vrot.lane.b32.xlu0 %v880, 127
    %v886 = vpop.permute.xlu0 %885
    %v889 = vadd.f32 %v763, %v884
    %v890 = vadd.f32 %v764, %v886
    %s891 = sld [smem:[#allocation2 + $0x97]]
    %v892 = vstv %s891
    %v893 = vmul.f32 %v892, %v777
    %v894 = vmul.f32 %v892, %v778
    %897 = vrot.lane.b32.xlu0 %v893, 127
    %v898 = vpop.permute.xlu0 %897
    %899 = vrot.lane.b32.xlu0 %v894, 127
    %v900 = vpop.permute.xlu0 %899
    %v903 = vadd.f32 %v769, %v898
    %v904 = vadd.f32 %v770, %v900
    %s905 = sld [smem:[#allocation2 + $0xa9]]
    %v906 = vstv %s905
    %v907 = vmul.f32 %v906, %v777
    %v908 = vmul.f32 %v906, %v778
    %911 = vrot.lane.b32.xlu0 %v907, 127
    %v912 = vpop.permute.xlu0 %911
    %913 = vrot.lane.b32.xlu0 %v908, 127
    %v914 = vpop.permute.xlu0 %913
    %v917 = vadd.f32 %v775, %v912
    %v918 = vadd.f32 %v776, %v914
    %s919 = sld [smem:[#allocation2 + $0x8]]
    %v920 = vstv %s919
    %v921 = vmul.f32 %v920, %v715
    %v922 = vmul.f32 %v920, %v716
    %925 = vrot.lane.b32.xlu0 %v921, 125
    %v926 = vpop.permute.xlu0 %925
    %927 = vrot.lane.b32.xlu0 %v922, 125
    %v928 = vpop.permute.xlu0 %927
    %v931 = vadd.f32 %v791, %v926
    %v932 = vadd.f32 %v792, %v928
    %s933 = sld [smem:[#allocation2 + $0x1a]]
    %v934 = vstv %s933
    %v935 = vmul.f32 %v934, %v715
    %v936 = vmul.f32 %v934, %v716
    %939 = vrot.lane.b32.xlu0 %v935, 125
    %v940 = vpop.permute.xlu0 %939
    %941 = vrot.lane.b32.xlu0 %v936, 125
    %v942 = vpop.permute.xlu0 %941
    %v945 = vadd.f32 %v805, %v940
    %v946 = vadd.f32 %v806, %v942
    %s947 = sld [smem:[#allocation2 + $0x2c]]
    %v948 = vstv %s947
    %v949 = vmul.f32 %v948, %v715
    %v950 = vmul.f32 %v948, %v716
    %953 = vrot.lane.b32.xlu0 %v949, 125
    %v954 = vpop.permute.xlu0 %953
    %955 = vrot.lane.b32.xlu0 %v950, 125
    %v956 = vpop.permute.xlu0 %955
    %v959 = vadd.f32 %v819, %v954
    %v960 = vadd.f32 %v820, %v956
    %s961 = sld [smem:[#allocation2 + $0x3e]]
    %v962 = vstv %s961
    %v963 = vmul.f32 %v962, %v715
    %v964 = vmul.f32 %v962, %v716
    %967 = vrot.lane.b32.xlu0 %v963, 125
    %v968 = vpop.permute.xlu0 %967
    %969 = vrot.lane.b32.xlu0 %v964, 125
    %v970 = vpop.permute.xlu0 %969
    %v973 = vadd.f32 %v833, %v968
    %v974 = vadd.f32 %v834, %v970
    %s975 = sld [smem:[#allocation2 + $0x50]]
    %v976 = vstv %s975
    %v977 = vmul.f32 %v976, %v715
    %v978 = vmul.f32 %v976, %v716
    %981 = vrot.lane.b32.xlu0 %v977, 125
    %v982 = vpop.permute.xlu0 %981
    %983 = vrot.lane.b32.xlu0 %v978, 125
    %v984 = vpop.permute.xlu0 %983
    %v987 = vadd.f32 %v847, %v982
    %v988 = vadd.f32 %v848, %v984
    %s989 = sld [smem:[#allocation2 + $0x62]]
    %v990 = vstv %s989
    %v991 = vmul.f32 %v990, %v715
    %v992 = vmul.f32 %v990, %v716
    %995 = vrot.lane.b32.xlu0 %v991, 125
    %v996 = vpop.permute.xlu0 %995
    %997 = vrot.lane.b32.xlu0 %v992, 125
    %v998 = vpop.permute.xlu0 %997
    %v1001 = vadd.f32 %v861, %v996
    %v1002 = vadd.f32 %v862, %v998
    %s1003 = sld [smem:[#allocation2 + $0x74]]
    %v1004 = vstv %s1003
    %v1005 = vmul.f32 %v1004, %v715
    %v1006 = vmul.f32 %v1004, %v716
    %1009 = vrot.lane.b32.xlu0 %v1005, 125
    %v1010 = vpop.permute.xlu0 %1009
    %1011 = vrot.lane.b32.xlu0 %v1006, 125
    %v1012 = vpop.permute.xlu0 %1011
    %v1015 = vadd.f32 %v875, %v1010
    %v1016 = vadd.f32 %v876, %v1012
    %s1017 = sld [smem:[#allocation2 + $0x86]]
    %v1018 = vstv %s1017
    %v1019 = vmul.f32 %v1018, %v715
    %v1020 = vmul.f32 %v1018, %v716
    %1023 = vrot.lane.b32.xlu0 %v1019, 125
    %v1024 = vpop.permute.xlu0 %1023
    %1025 = vrot.lane.b32.xlu0 %v1020, 125
    %v1026 = vpop.permute.xlu0 %1025
    %v1029 = vadd.f32 %v889, %v1024
    %v1030 = vadd.f32 %v890, %v1026
    %s1031 = sld [smem:[#allocation2 + $0x98]]
    %v1032 = vstv %s1031
    %v1033 = vmul.f32 %v1032, %v715
    %v1034 = vmul.f32 %v1032, %v716
    %1037 = vrot.lane.b32.xlu0 %v1033, 125
    %v1038 = vpop.permute.xlu0 %1037
    %1039 = vrot.lane.b32.xlu0 %v1034, 125
    %v1040 = vpop.permute.xlu0 %1039
    %v1043 = vadd.f32 %v903, %v1038
    %v1044 = vadd.f32 %v904, %v1040
    %s1045 = sld [smem:[#allocation2 + $0xaa]]
    %v1046 = vstv %s1045
    %v1047 = vmul.f32 %v1046, %v715
    %v1048 = vmul.f32 %v1046, %v716
    %1051 = vrot.lane.b32.xlu0 %v1047, 125
    %v1052 = vpop.permute.xlu0 %1051
    %1053 = vrot.lane.b32.xlu0 %v1048, 125
    %v1054 = vpop.permute.xlu0 %1053
    %v1057 = vadd.f32 %v917, %v1052
    %v1058 = vadd.f32 %v918, %v1054
    %s1059 = scalar_lea.vmem %s1, 32
    %v1060 = vld [vmem:[%s1059] sm:$0xff]
    %v1061 = vld [vmem:[%s1059 + $0x10] sm:$0xff]
    %s1062 = sld [smem:[#allocation2 + $0x9]]
    %v1063 = vstv %s1062
    %v1064 = vmul.f32 %v1063, %v1060
    %v1065 = vmul.f32 %v1063, %v1061
    %v1066 = vadd.f32 %v931, %v1064
    %v1067 = vadd.f32 %v932, %v1065
    %s1068 = sld [smem:[#allocation2 + $0x1b]]
    %v1069 = vstv %s1068
    %v1070 = vmul.f32 %v1069, %v1060
    %v1071 = vmul.f32 %v1069, %v1061
    %v1072 = vadd.f32 %v945, %v1070
    %v1073 = vadd.f32 %v946, %v1071
    %s1074 = sld [smem:[#allocation2 + $0x2d]]
    %v1075 = vstv %s1074
    %v1076 = vmul.f32 %v1075, %v1060
    %v1077 = vmul.f32 %v1075, %v1061
    %v1078 = vadd.f32 %v959, %v1076
    %v1079 = vadd.f32 %v960, %v1077
    %s1080 = sld [smem:[#allocation2 + $0x3f]]
    %v1081 = vstv %s1080
    %v1082 = vmul.f32 %v1081, %v1060
    %v1083 = vmul.f32 %v1081, %v1061
    %v1084 = vadd.f32 %v973, %v1082
    %v1085 = vadd.f32 %v974, %v1083
    %s1086 = sld [smem:[#allocation2 + $0x51]]
    %v1087 = vstv %s1086
    %v1088 = vmul.f32 %v1087, %v1060
    %v1089 = vmul.f32 %v1087, %v1061
    %v1090 = vadd.f32 %v987, %v1088
    %v1091 = vadd.f32 %v988, %v1089
    %s1092 = sld [smem:[#allocation2 + $0x63]]
    %v1093 = vstv %s1092
    %v1094 = vmul.f32 %v1093, %v1060
    %v1095 = vmul.f32 %v1093, %v1061
    %v1096 = vadd.f32 %v1001, %v1094
    %v1097 = vadd.f32 %v1002, %v1095
    %s1098 = sld [smem:[#allocation2 + $0x75]]
    %v1099 = vstv %s1098
    %v1100 = vmul.f32 %v1099, %v1060
    %v1101 = vmul.f32 %v1099, %v1061
    %v1102 = vadd.f32 %v1015, %v1100
    %v1103 = vadd.f32 %v1016, %v1101
    %s1104 = sld [smem:[#allocation2 + $0x87]]
    %v1105 = vstv %s1104
    %v1106 = vmul.f32 %v1105, %v1060
    %v1107 = vmul.f32 %v1105, %v1061
    %v1108 = vadd.f32 %v1029, %v1106
    %v1109 = vadd.f32 %v1030, %v1107
    %s1110 = sld [smem:[#allocation2 + $0x99]]
    %v1111 = vstv %s1110
    %v1112 = vmul.f32 %v1111, %v1060
    %v1113 = vmul.f32 %v1111, %v1061
    %v1114 = vadd.f32 %v1043, %v1112
    %v1115 = vadd.f32 %v1044, %v1113
    %s1116 = sld [smem:[#allocation2 + $0xab]]
    %v1117 = vstv %s1116
    %v1118 = vmul.f32 %v1117, %v1060
    %v1119 = vmul.f32 %v1117, %v1061
    %v1120 = vadd.f32 %v1057, %v1118
    %v1121 = vadd.f32 %v1058, %v1119
    %s1122 = scalar_lea.vmem %s1, 96
    %v1123 = vld [vmem:[%s1122] sm:$0xff]
    %v1124 = vld [vmem:[%s1122 + $0x10] sm:$0xff]
    %s1125 = sld [smem:[#allocation2 + $0xa]]
    %v1126 = vstv %s1125
    %v1127 = vmul.f32 %v1126, %v1123
    %v1128 = vmul.f32 %v1126, %v1124
    %1131 = vrot.lane.b32.xlu0 %v1127, 127
    %v1132 = vpop.permute.xlu0 %1131
    %1133 = vrot.lane.b32.xlu0 %v1128, 127
    %v1134 = vpop.permute.xlu0 %1133
    %v1137 = vadd.f32 %v1066, %v1132
    %v1138 = vadd.f32 %v1067, %v1134
    %s1139 = sld [smem:[#allocation2 + $0x1c]]
    %v1140 = vstv %s1139
    %v1141 = vmul.f32 %v1140, %v1123
    %v1142 = vmul.f32 %v1140, %v1124
    %1145 = vrot.lane.b32.xlu0 %v1141, 127
    %v1146 = vpop.permute.xlu0 %1145
    %1147 = vrot.lane.b32.xlu0 %v1142, 127
    %v1148 = vpop.permute.xlu0 %1147
    %v1151 = vadd.f32 %v1072, %v1146
    %v1152 = vadd.f32 %v1073, %v1148
    %s1153 = sld [smem:[#allocation2 + $0x2e]]
    %v1154 = vstv %s1153
    %v1155 = vmul.f32 %v1154, %v1123
    %v1156 = vmul.f32 %v1154, %v1124
    %1159 = vrot.lane.b32.xlu0 %v1155, 127
    %v1160 = vpop.permute.xlu0 %1159
    %1161 = vrot.lane.b32.xlu0 %v1156, 127
    %v1162 = vpop.permute.xlu0 %1161
    %v1165 = vadd.f32 %v1078, %v1160
    %v1166 = vadd.f32 %v1079, %v1162
    %s1167 = sld [smem:[#allocation2 + $0x40]]
    %v1168 = vstv %s1167
    %v1169 = vmul.f32 %v1168, %v1123
    %v1170 = vmul.f32 %v1168, %v1124
    %1173 = vrot.lane.b32.xlu0 %v1169, 127
    %v1174 = vpop.permute.xlu0 %1173
    %1175 = vrot.lane.b32.xlu0 %v1170, 127
    %v1176 = vpop.permute.xlu0 %1175
    %v1179 = vadd.f32 %v1084, %v1174
    %v1180 = vadd.f32 %v1085, %v1176
    %s1181 = sld [smem:[#allocation2 + $0x52]]
    %v1182 = vstv %s1181
    %v1183 = vmul.f32 %v1182, %v1123
    %v1184 = vmul.f32 %v1182, %v1124
    %1187 = vrot.lane.b32.xlu0 %v1183, 127
    %v1188 = vpop.permute.xlu0 %1187
    %1189 = vrot.lane.b32.xlu0 %v1184, 127
    %v1190 = vpop.permute.xlu0 %1189
    %v1193 = vadd.f32 %v1090, %v1188
    %v1194 = vadd.f32 %v1091, %v1190
    %s1195 = sld [smem:[#allocation2 + $0x64]]
    %v1196 = vstv %s1195
    %v1197 = vmul.f32 %v1196, %v1123
    %v1198 = vmul.f32 %v1196, %v1124
    %1201 = vrot.lane.b32.xlu0 %v1197, 127
    %v1202 = vpop.permute.xlu0 %1201
    %1203 = vrot.lane.b32.xlu0 %v1198, 127
    %v1204 = vpop.permute.xlu0 %1203
    %v1207 = vadd.f32 %v1096, %v1202
    %v1208 = vadd.f32 %v1097, %v1204
    %s1209 = sld [smem:[#allocation2 + $0x76]]
    %v1210 = vstv %s1209
    %v1211 = vmul.f32 %v1210, %v1123
    %v1212 = vmul.f32 %v1210, %v1124
    %1215 = vrot.lane.b32.xlu0 %v1211, 127
    %v1216 = vpop.permute.xlu0 %1215
    %1217 = vrot.lane.b32.xlu0 %v1212, 127
    %v1218 = vpop.permute.xlu0 %1217
    %v1221 = vadd.f32 %v1102, %v1216
    %v1222 = vadd.f32 %v1103, %v1218
    %s1223 = sld [smem:[#allocation2 + $0x88]]
    %v1224 = vstv %s1223
    %v1225 = vmul.f32 %v1224, %v1123
    %v1226 = vmul.f32 %v1224, %v1124
    %1229 = vrot.lane.b32.xlu0 %v1225, 127
    %v1230 = vpop.permute.xlu0 %1229
    %1231 = vrot.lane.b32.xlu0 %v1226, 127
    %v1232 = vpop.permute.xlu0 %1231
    %v1235 = vadd.f32 %v1108, %v1230
    %v1236 = vadd.f32 %v1109, %v1232
    %s1237 = sld [smem:[#allocation2 + $0x9a]]
    %v1238 = vstv %s1237
    %v1239 = vmul.f32 %v1238, %v1123
    %v1240 = vmul.f32 %v1238, %v1124
    %1243 = vrot.lane.b32.xlu0 %v1239, 127
    %v1244 = vpop.permute.xlu0 %1243
    %1245 = vrot.lane.b32.xlu0 %v1240, 127
    %v1246 = vpop.permute.xlu0 %1245
    %v1249 = vadd.f32 %v1114, %v1244
    %v1250 = vadd.f32 %v1115, %v1246
    %s1251 = sld [smem:[#allocation2 + $0xac]]
    %v1252 = vstv %s1251
    %v1253 = vmul.f32 %v1252, %v1123
    %v1254 = vmul.f32 %v1252, %v1124
    %1257 = vrot.lane.b32.xlu0 %v1253, 127
    %v1258 = vpop.permute.xlu0 %1257
    %1259 = vrot.lane.b32.xlu0 %v1254, 127
    %v1260 = vpop.permute.xlu0 %1259
    %v1263 = vadd.f32 %v1120, %v1258
    %v1264 = vadd.f32 %v1121, %v1260
    %s1265 = sld [smem:[#allocation2 + $0xb]]
    %v1266 = vstv %s1265
    %v1267 = vmul.f32 %v1266, %v1060
    %v1268 = vmul.f32 %v1266, %v1061
    %1271 = vrot.lane.b32.xlu0 %v1267, 125
    %v1272 = vpop.permute.xlu0 %1271
    %1273 = vrot.lane.b32.xlu0 %v1268, 125
    %v1274 = vpop.permute.xlu0 %1273
    %v1277 = vadd.f32 %v1137, %v1272
    %v1278 = vadd.f32 %v1138, %v1274
    %s1279 = sld [smem:[#allocation2 + $0x1d]]
    %v1280 = vstv %s1279
    %v1281 = vmul.f32 %v1280, %v1060
    %v1282 = vmul.f32 %v1280, %v1061
    %1285 = vrot.lane.b32.xlu0 %v1281, 125
    %v1286 = vpop.permute.xlu0 %1285
    %1287 = vrot.lane.b32.xlu0 %v1282, 125
    %v1288 = vpop.permute.xlu0 %1287
    %v1291 = vadd.f32 %v1151, %v1286
    %v1292 = vadd.f32 %v1152, %v1288
    %s1293 = sld [smem:[#allocation2 + $0x2f]]
    %v1294 = vstv %s1293
    %v1295 = vmul.f32 %v1294, %v1060
    %v1296 = vmul.f32 %v1294, %v1061
    %1299 = vrot.lane.b32.xlu0 %v1295, 125
    %v1300 = vpop.permute.xlu0 %1299
    %1301 = vrot.lane.b32.xlu0 %v1296, 125
    %v1302 = vpop.permute.xlu0 %1301
    %v1305 = vadd.f32 %v1165, %v1300
    %v1306 = vadd.f32 %v1166, %v1302
    %s1307 = sld [smem:[#allocation2 + $0x41]]
    %v1308 = vstv %s1307
    %v1309 = vmul.f32 %v1308, %v1060
    %v1310 = vmul.f32 %v1308, %v1061
    %1313 = vrot.lane.b32.xlu0 %v1309, 125
    %v1314 = vpop.permute.xlu0 %1313
    %1315 = vrot.lane.b32.xlu0 %v1310, 125
    %v1316 = vpop.permute.xlu0 %1315
    %v1319 = vadd.f32 %v1179, %v1314
    %v1320 = vadd.f32 %v1180, %v1316
    %s1321 = sld [smem:[#allocation2 + $0x53]]
    %v1322 = vstv %s1321
    %v1323 = vmul.f32 %v1322, %v1060
    %v1324 = vmul.f32 %v1322, %v1061
    %1327 = vrot.lane.b32.xlu0 %v1323, 125
    %v1328 = vpop.permute.xlu0 %1327
    %1329 = vrot.lane.b32.xlu0 %v1324, 125
    %v1330 = vpop.permute.xlu0 %1329
    %v1333 = vadd.f32 %v1193, %v1328
    %v1334 = vadd.f32 %v1194, %v1330
    %s1335 = sld [smem:[#allocation2 + $0x65]]
    %v1336 = vstv %s1335
    %v1337 = vmul.f32 %v1336, %v1060
    %v1338 = vmul.f32 %v1336, %v1061
    %1341 = vrot.lane.b32.xlu0 %v1337, 125
    %v1342 = vpop.permute.xlu0 %1341
    %1343 = vrot.lane.b32.xlu0 %v1338, 125
    %v1344 = vpop.permute.xlu0 %1343
    %v1347 = vadd.f32 %v1207, %v1342
    %v1348 = vadd.f32 %v1208, %v1344
    %s1349 = sld [smem:[#allocation2 + $0x77]]
    %v1350 = vstv %s1349
    %v1351 = vmul.f32 %v1350, %v1060
    %v1352 = vmul.f32 %v1350, %v1061
    %1355 = vrot.lane.b32.xlu0 %v1351, 125
    %v1356 = vpop.permute.xlu0 %1355
    %1357 = vrot.lane.b32.xlu0 %v1352, 125
    %v1358 = vpop.permute.xlu0 %1357
    %v1361 = vadd.f32 %v1221, %v1356
    %v1362 = vadd.f32 %v1222, %v1358
    %s1363 = sld [smem:[#allocation2 + $0x89]]
    %v1364 = vstv %s1363
    %v1365 = vmul.f32 %v1364, %v1060
    %v1366 = vmul.f32 %v1364, %v1061
    %1369 = vrot.lane.b32.xlu0 %v1365, 125
    %v1370 = vpop.permute.xlu0 %1369
    %1371 = vrot.lane.b32.xlu0 %v1366, 125
    %v1372 = vpop.permute.xlu0 %1371
    %v1375 = vadd.f32 %v1235, %v1370
    %v1376 = vadd.f32 %v1236, %v1372
    %s1377 = sld [smem:[#allocation2 + $0x9b]]
    %v1378 = vstv %s1377
    %v1379 = vmul.f32 %v1378, %v1060
    %v1380 = vmul.f32 %v1378, %v1061
    %1383 = vrot.lane.b32.xlu0 %v1379, 125
    %v1384 = vpop.permute.xlu0 %1383
    %1385 = vrot.lane.b32.xlu0 %v1380, 125
    %v1386 = vpop.permute.xlu0 %1385
    %v1389 = vadd.f32 %v1249, %v1384
    %v1390 = vadd.f32 %v1250, %v1386
    %s1391 = sld [smem:[#allocation2 + $0xad]]
    %v1392 = vstv %s1391
    %v1393 = vmul.f32 %v1392, %v1060
    %v1394 = vmul.f32 %v1392, %v1061
    %1397 = vrot.lane.b32.xlu0 %v1393, 125
    %v1398 = vpop.permute.xlu0 %1397
    %1399 = vrot.lane.b32.xlu0 %v1394, 125
    %v1400 = vpop.permute.xlu0 %1399
    %v1403 = vadd.f32 %v1263, %v1398
    %v1404 = vadd.f32 %v1264, %v1400
    %s1405 = scalar_lea.vmem %s1, 160
    %v1406 = vld [vmem:[%s1405 + $0x1] sm:$0xff]
    %v1407 = vld [vmem:[%s1405 + $0x11] sm:$0xff]
    %s1408 = sld [smem:[#allocation2 + $0xc]]
    %v1409 = vstv %s1408
    %v1410 = vmul.f32 %v1409, %v1406
    %v1411 = vmul.f32 %v1409, %v1407
    %v1412 = vadd.f32 %v1277, %v1410
    %v1413 = vadd.f32 %v1278, %v1411
    %s1414 = sld [smem:[#allocation2 + $0x1e]]
    %v1415 = vstv %s1414
    %v1416 = vmul.f32 %v1415, %v1406
    %v1417 = vmul.f32 %v1415, %v1407
    %v1418 = vadd.f32 %v1291, %v1416
    %v1419 = vadd.f32 %v1292, %v1417
    %s1420 = sld [smem:[#allocation2 + $0x30]]
    %v1421 = vstv %s1420
    %v1422 = vmul.f32 %v1421, %v1406
    %v1423 = vmul.f32 %v1421, %v1407
    %v1424 = vadd.f32 %v1305, %v1422
    %v1425 = vadd.f32 %v1306, %v1423
    %s1426 = sld [smem:[#allocation2 + $0x42]]
    %v1427 = vstv %s1426
    %v1428 = vmul.f32 %v1427, %v1406
    %v1429 = vmul.f32 %v1427, %v1407
    %v1430 = vadd.f32 %v1319, %v1428
    %v1431 = vadd.f32 %v1320, %v1429
    %s1432 = sld [smem:[#allocation2 + $0x54]]
    %v1433 = vstv %s1432
    %v1434 = vmul.f32 %v1433, %v1406
    %v1435 = vmul.f32 %v1433, %v1407
    %v1436 = vadd.f32 %v1333, %v1434
    %v1437 = vadd.f32 %v1334, %v1435
    %s1438 = sld [smem:[#allocation2 + $0x66]]
    %v1439 = vstv %s1438
    %v1440 = vmul.f32 %v1439, %v1406
    %v1441 = vmul.f32 %v1439, %v1407
    %v1442 = vadd.f32 %v1347, %v1440
    %v1443 = vadd.f32 %v1348, %v1441
    %s1444 = sld [smem:[#allocation2 + $0x78]]
    %v1445 = vstv %s1444
    %v1446 = vmul.f32 %v1445, %v1406
    %v1447 = vmul.f32 %v1445, %v1407
    %v1448 = vadd.f32 %v1361, %v1446
    %v1449 = vadd.f32 %v1362, %v1447
    %s1450 = sld [smem:[#allocation2 + $0x8a]]
    %v1451 = vstv %s1450
    %v1452 = vmul.f32 %v1451, %v1406
    %v1453 = vmul.f32 %v1451, %v1407
    %v1454 = vadd.f32 %v1375, %v1452
    %v1455 = vadd.f32 %v1376, %v1453
    %s1456 = sld [smem:[#allocation2 + $0x9c]]
    %v1457 = vstv %s1456
    %v1458 = vmul.f32 %v1457, %v1406
    %v1459 = vmul.f32 %v1457, %v1407
    %v1460 = vadd.f32 %v1389, %v1458
    %v1461 = vadd.f32 %v1390, %v1459
    %s1462 = sld [smem:[#allocation2 + $0xae]]
    %v1463 = vstv %s1462
    %v1464 = vmul.f32 %v1463, %v1406
    %v1465 = vmul.f32 %v1463, %v1407
    %v1466 = vadd.f32 %v1403, %v1464
    %v1467 = vadd.f32 %v1404, %v1465
    %s1468 = scalar_lea.vmem %s1, 224
    %v1469 = vld [vmem:[%s1468 + $0x1] sm:$0xff]
    %v1470 = vld [vmem:[%s1468 + $0x11] sm:$0xff]
    %s1471 = sld [smem:[#allocation2 + $0xd]]
    %v1472 = vstv %s1471
    %v1473 = vmul.f32 %v1472, %v1469
    %v1474 = vmul.f32 %v1472, %v1470
    %1477 = vrot.lane.b32.xlu0 %v1473, 127
    %v1478 = vpop.permute.xlu0 %1477
    %1479 = vrot.lane.b32.xlu0 %v1474, 127
    %v1480 = vpop.permute.xlu0 %1479
    %v1483 = vadd.f32 %v1412, %v1478
    %v1484 = vadd.f32 %v1413, %v1480
    %s1485 = sld [smem:[#allocation2 + $0x1f]]
    %v1486 = vstv %s1485
    %v1487 = vmul.f32 %v1486, %v1469
    %v1488 = vmul.f32 %v1486, %v1470
    %1491 = vrot.lane.b32.xlu0 %v1487, 127
    %v1492 = vpop.permute.xlu0 %1491
    %1493 = vrot.lane.b32.xlu0 %v1488, 127
    %v1494 = vpop.permute.xlu0 %1493
    %v1497 = vadd.f32 %v1418, %v1492
    %v1498 = vadd.f32 %v1419, %v1494
    %s1499 = sld [smem:[#allocation2 + $0x31]]
    %v1500 = vstv %s1499
    %v1501 = vmul.f32 %v1500, %v1469
    %v1502 = vmul.f32 %v1500, %v1470
    %1505 = vrot.lane.b32.xlu0 %v1501, 127
    %v1506 = vpop.permute.xlu0 %1505
    %1507 = vrot.lane.b32.xlu0 %v1502, 127
    %v1508 = vpop.permute.xlu0 %1507
    %v1511 = vadd.f32 %v1424, %v1506
    %v1512 = vadd.f32 %v1425, %v1508
    %s1513 = sld [smem:[#allocation2 + $0x43]]
    %v1514 = vstv %s1513
    %v1515 = vmul.f32 %v1514, %v1469
    %v1516 = vmul.f32 %v1514, %v1470
    %1519 = vrot.lane.b32.xlu0 %v1515, 127
    %v1520 = vpop.permute.xlu0 %1519
    %1521 = vrot.lane.b32.xlu0 %v1516, 127
    %v1522 = vpop.permute.xlu0 %1521
    %v1525 = vadd.f32 %v1430, %v1520
    %v1526 = vadd.f32 %v1431, %v1522
    %s1527 = sld [smem:[#allocation2 + $0x55]]
    %v1528 = vstv %s1527
    %v1529 = vmul.f32 %v1528, %v1469
    %v1530 = vmul.f32 %v1528, %v1470
    %1533 = vrot.lane.b32.xlu0 %v1529, 127
    %v1534 = vpop.permute.xlu0 %1533
    %1535 = vrot.lane.b32.xlu0 %v1530, 127
    %v1536 = vpop.permute.xlu0 %1535
    %v1539 = vadd.f32 %v1436, %v1534
    %v1540 = vadd.f32 %v1437, %v1536
    %s1541 = sld [smem:[#allocation2 + $0x67]]
    %v1542 = vstv %s1541
    %v1543 = vmul.f32 %v1542, %v1469
    %v1544 = vmul.f32 %v1542, %v1470
    %1547 = vrot.lane.b32.xlu0 %v1543, 127
    %v1548 = vpop.permute.xlu0 %1547
    %1549 = vrot.lane.b32.xlu0 %v1544, 127
    %v1550 = vpop.permute.xlu0 %1549
    %v1553 = vadd.f32 %v1442, %v1548
    %v1554 = vadd.f32 %v1443, %v1550
    %s1555 = sld [smem:[#allocation2 + $0x79]]
    %v1556 = vstv %s1555
    %v1557 = vmul.f32 %v1556, %v1469
    %v1558 = vmul.f32 %v1556, %v1470
    %1561 = vrot.lane.b32.xlu0 %v1557, 127
    %v1562 = vpop.permute.xlu0 %1561
    %1563 = vrot.lane.b32.xlu0 %v1558, 127
    %v1564 = vpop.permute.xlu0 %1563
    %v1567 = vadd.f32 %v1448, %v1562
    %v1568 = vadd.f32 %v1449, %v1564
    %s1569 = sld [smem:[#allocation2 + $0x8b]]
    %v1570 = vstv %s1569
    %v1571 = vmul.f32 %v1570, %v1469
    %v1572 = vmul.f32 %v1570, %v1470
    %1575 = vrot.lane.b32.xlu0 %v1571, 127
    %v1576 = vpop.permute.xlu0 %1575
    %1577 = vrot.lane.b32.xlu0 %v1572, 127
    %v1578 = vpop.permute.xlu0 %1577
    %v1581 = vadd.f32 %v1454, %v1576
    %v1582 = vadd.f32 %v1455, %v1578
    %s1583 = sld [smem:[#allocation2 + $0x9d]]
    %v1584 = vstv %s1583
    %v1585 = vmul.f32 %v1584, %v1469
    %v1586 = vmul.f32 %v1584, %v1470
    %1589 = vrot.lane.b32.xlu0 %v1585, 127
    %v1590 = vpop.permute.xlu0 %1589
    %1591 = vrot.lane.b32.xlu0 %v1586, 127
    %v1592 = vpop.permute.xlu0 %1591
    %v1595 = vadd.f32 %v1460, %v1590
    %v1596 = vadd.f32 %v1461, %v1592
    %s1597 = sld [smem:[#allocation2 + $0xaf]]
    %v1598 = vstv %s1597
    %v1599 = vmul.f32 %v1598, %v1469
    %v1600 = vmul.f32 %v1598, %v1470
    %1603 = vrot.lane.b32.xlu0 %v1599, 127
    %v1604 = vpop.permute.xlu0 %1603
    %1605 = vrot.lane.b32.xlu0 %v1600, 127
    %v1606 = vpop.permute.xlu0 %1605
    %v1609 = vadd.f32 %v1466, %v1604
    %v1610 = vadd.f32 %v1467, %v1606
    %s1611 = sld [smem:[#allocation2 + $0xe]]
    %v1612 = vstv %s1611
    %v1613 = vmul.f32 %v1612, %v1406
    %v1614 = vmul.f32 %v1612, %v1407
    %1617 = vrot.lane.b32.xlu0 %v1613, 125
    %v1618 = vpop.permute.xlu0 %1617
    %1619 = vrot.lane.b32.xlu0 %v1614, 125
    %v1620 = vpop.permute.xlu0 %1619
    %v1623 = vadd.f32 %v1483, %v1618
    %v1624 = vadd.f32 %v1484, %v1620
    %s1625 = sld [smem:[#allocation2 + $0x20]]
    %v1626 = vstv %s1625
    %v1627 = vmul.f32 %v1626, %v1406
    %v1628 = vmul.f32 %v1626, %v1407
    %1631 = vrot.lane.b32.xlu0 %v1627, 125
    %v1632 = vpop.permute.xlu0 %1631
    %1633 = vrot.lane.b32.xlu0 %v1628, 125
    %v1634 = vpop.permute.xlu0 %1633
    %v1637 = vadd.f32 %v1497, %v1632
    %v1638 = vadd.f32 %v1498, %v1634
    %s1639 = sld [smem:[#allocation2 + $0x32]]
    %v1640 = vstv %s1639
    %v1641 = vmul.f32 %v1640, %v1406
    %v1642 = vmul.f32 %v1640, %v1407
    %1645 = vrot.lane.b32.xlu0 %v1641, 125
    %v1646 = vpop.permute.xlu0 %1645
    %1647 = vrot.lane.b32.xlu0 %v1642, 125
    %v1648 = vpop.permute.xlu0 %1647
    %v1651 = vadd.f32 %v1511, %v1646
    %v1652 = vadd.f32 %v1512, %v1648
    %s1653 = sld [smem:[#allocation2 + $0x44]]
    %v1654 = vstv %s1653
    %v1655 = vmul.f32 %v1654, %v1406
    %v1656 = vmul.f32 %v1654, %v1407
    %1659 = vrot.lane.b32.xlu0 %v1655, 125
    %v1660 = vpop.permute.xlu0 %1659
    %1661 = vrot.lane.b32.xlu0 %v1656, 125
    %v1662 = vpop.permute.xlu0 %1661
    %v1665 = vadd.f32 %v1525, %v1660
    %v1666 = vadd.f32 %v1526, %v1662
    %s1667 = sld [smem:[#allocation2 + $0x56]]
    %v1668 = vstv %s1667
    %v1669 = vmul.f32 %v1668, %v1406
    %v1670 = vmul.f32 %v1668, %v1407
    %1673 = vrot.lane.b32.xlu0 %v1669, 125
    %v1674 = vpop.permute.xlu0 %1673
    %1675 = vrot.lane.b32.xlu0 %v1670, 125
    %v1676 = vpop.permute.xlu0 %1675
    %v1679 = vadd.f32 %v1539, %v1674
    %v1680 = vadd.f32 %v1540, %v1676
    %s1681 = sld [smem:[#allocation2 + $0x68]]
    %v1682 = vstv %s1681
    %v1683 = vmul.f32 %v1682, %v1406
    %v1684 = vmul.f32 %v1682, %v1407
    %1687 = vrot.lane.b32.xlu0 %v1683, 125
    %v1688 = vpop.permute.xlu0 %1687
    %1689 = vrot.lane.b32.xlu0 %v1684, 125
    %v1690 = vpop.permute.xlu0 %1689
    %v1693 = vadd.f32 %v1553, %v1688
    %v1694 = vadd.f32 %v1554, %v1690
    %s1695 = sld [smem:[#allocation2 + $0x7a]]
    %v1696 = vstv %s1695
    %v1697 = vmul.f32 %v1696, %v1406
    %v1698 = vmul.f32 %v1696, %v1407
    %1701 = vrot.lane.b32.xlu0 %v1697, 125
    %v1702 = vpop.permute.xlu0 %1701
    %1703 = vrot.lane.b32.xlu0 %v1698, 125
    %v1704 = vpop.permute.xlu0 %1703
    %v1707 = vadd.f32 %v1567, %v1702
    %v1708 = vadd.f32 %v1568, %v1704
    %s1709 = sld [smem:[#allocation2 + $0x8c]]
    %v1710 = vstv %s1709
    %v1711 = vmul.f32 %v1710, %v1406
    %v1712 = vmul.f32 %v1710, %v1407
    %1715 = vrot.lane.b32.xlu0 %v1711, 125
    %v1716 = vpop.permute.xlu0 %1715
    %1717 = vrot.lane.b32.xlu0 %v1712, 125
    %v1718 = vpop.permute.xlu0 %1717
    %v1721 = vadd.f32 %v1581, %v1716
    %v1722 = vadd.f32 %v1582, %v1718
    %s1723 = sld [smem:[#allocation2 + $0x9e]]
    %v1724 = vstv %s1723
    %v1725 = vmul.f32 %v1724, %v1406
    %v1726 = vmul.f32 %v1724, %v1407
    %1729 = vrot.lane.b32.xlu0 %v1725, 125
    %v1730 = vpop.permute.xlu0 %1729
    %1731 = vrot.lane.b32.xlu0 %v1726, 125
    %v1732 = vpop.permute.xlu0 %1731
    %v1735 = vadd.f32 %v1595, %v1730
    %v1736 = vadd.f32 %v1596, %v1732
    %s1737 = sld [smem:[#allocation2 + $0xb0]]
    %v1738 = vstv %s1737
    %v1739 = vmul.f32 %v1738, %v1406
    %v1740 = vmul.f32 %v1738, %v1407
    %1743 = vrot.lane.b32.xlu0 %v1739, 125
    %v1744 = vpop.permute.xlu0 %1743
    %1745 = vrot.lane.b32.xlu0 %v1740, 125
    %v1746 = vpop.permute.xlu0 %1745
    %v1749 = vadd.f32 %v1609, %v1744
    %v1750 = vadd.f32 %v1610, %v1746
    %v1751 = vld [vmem:[%s1059 + $0x3] sm:$0xff]
    %v1752 = vld [vmem:[%s1059 + $0x13] sm:$0xff]
    %s1753 = sld [smem:[#allocation2 + $0xf]]
    %v1754 = vstv %s1753
    %v1755 = vmul.f32 %v1754, %v1751
    %v1756 = vmul.f32 %v1754, %v1752
    %v1757 = vadd.f32 %v1623, %v1755
    %v1758 = vadd.f32 %v1624, %v1756
    %s1759 = sld [smem:[#allocation2 + $0x21]]
    %v1760 = vstv %s1759
    %v1761 = vmul.f32 %v1760, %v1751
    %v1762 = vmul.f32 %v1760, %v1752
    %v1763 = vadd.f32 %v1637, %v1761
    %v1764 = vadd.f32 %v1638, %v1762
    %s1765 = sld [smem:[#allocation2 + $0x33]]
    %v1766 = vstv %s1765
    %v1767 = vmul.f32 %v1766, %v1751
    %v1768 = vmul.f32 %v1766, %v1752
    %v1769 = vadd.f32 %v1651, %v1767
    %v1770 = vadd.f32 %v1652, %v1768
    %s1771 = sld [smem:[#allocation2 + $0x45]]
    %v1772 = vstv %s1771
    %v1773 = vmul.f32 %v1772, %v1751
    %v1774 = vmul.f32 %v1772, %v1752
    %v1775 = vadd.f32 %v1665, %v1773
    %v1776 = vadd.f32 %v1666, %v1774
    %s1777 = sld [smem:[#allocation2 + $0x57]]
    %v1778 = vstv %s1777
    %v1779 = vmul.f32 %v1778, %v1751
    %v1780 = vmul.f32 %v1778, %v1752
    %v1781 = vadd.f32 %v1679, %v1779
    %v1782 = vadd.f32 %v1680, %v1780
    %s1783 = sld [smem:[#allocation2 + $0x69]]
    %v1784 = vstv %s1783
    %v1785 = vmul.f32 %v1784, %v1751
    %v1786 = vmul.f32 %v1784, %v1752
    %v1787 = vadd.f32 %v1693, %v1785
    %v1788 = vadd.f32 %v1694, %v1786
    %s1789 = sld [smem:[#allocation2 + $0x7b]]
    %v1790 = vstv %s1789
    %v1791 = vmul.f32 %v1790, %v1751
    %v1792 = vmul.f32 %v1790, %v1752
    %v1793 = vadd.f32 %v1707, %v1791
    %v1794 = vadd.f32 %v1708, %v1792
    %s1795 = sld [smem:[#allocation2 + $0x8d]]
    %v1796 = vstv %s1795
    %v1797 = vmul.f32 %v1796, %v1751
    %v1798 = vmul.f32 %v1796, %v1752
    %v1799 = vadd.f32 %v1721, %v1797
    %v1800 = vadd.f32 %v1722, %v1798
    %s1801 = sld [smem:[#allocation2 + $0x9f]]
    %v1802 = vstv %s1801
    %v1803 = vmul.f32 %v1802, %v1751
    %v1804 = vmul.f32 %v1802, %v1752
    %v1805 = vadd.f32 %v1735, %v1803
    %v1806 = vadd.f32 %v1736, %v1804
    %s1807 = sld [smem:[#allocation2 + $0xb1]]
    %v1808 = vstv %s1807
    %v1809 = vmul.f32 %v1808, %v1751
    %v1810 = vmul.f32 %v1808, %v1752
    %v1811 = vadd.f32 %v1749, %v1809
    %v1812 = vadd.f32 %v1750, %v1810
    %v1813 = vld [vmem:[%s1122 + $0x3] sm:$0xff]
    %v1814 = vld [vmem:[%s1122 + $0x13] sm:$0xff]
    %s1815 = sld [smem:[#allocation2 + $0x10]]
    %v1816 = vstv %s1815
    %v1817 = vmul.f32 %v1816, %v1813
    %v1818 = vmul.f32 %v1816, %v1814
    %1821 = vrot.lane.b32.xlu0 %v1817, 127
    %v1822 = vpop.permute.xlu0 %1821
    %1823 = vrot.lane.b32.xlu0 %v1818, 127
    %v1824 = vpop.permute.xlu0 %1823
    %v1827 = vadd.f32 %v1757, %v1822
    %v1828 = vadd.f32 %v1758, %v1824
    %s1829 = sld [smem:[#allocation2 + $0x22]]
    %v1830 = vstv %s1829
    %v1831 = vmul.f32 %v1830, %v1813
    %v1832 = vmul.f32 %v1830, %v1814
    %1835 = vrot.lane.b32.xlu0 %v1831, 127
    %v1836 = vpop.permute.xlu0 %1835
    %1837 = vrot.lane.b32.xlu0 %v1832, 127
    %v1838 = vpop.permute.xlu0 %1837
    %v1841 = vadd.f32 %v1763, %v1836
    %v1842 = vadd.f32 %v1764, %v1838
    %s1843 = sld [smem:[#allocation2 + $0x34]]
    %v1844 = vstv %s1843
    %v1845 = vmul.f32 %v1844, %v1813
    %v1846 = vmul.f32 %v1844, %v1814
    %1849 = vrot.lane.b32.xlu0 %v1845, 127
    %v1850 = vpop.permute.xlu0 %1849
    %1851 = vrot.lane.b32.xlu0 %v1846, 127
    %v1852 = vpop.permute.xlu0 %1851
    %v1855 = vadd.f32 %v1769, %v1850
    %v1856 = vadd.f32 %v1770, %v1852
    %s1857 = sld [smem:[#allocation2 + $0x46]]
    %v1858 = vstv %s1857
    %v1859 = vmul.f32 %v1858, %v1813
    %v1860 = vmul.f32 %v1858, %v1814
    %1863 = vrot.lane.b32.xlu0 %v1859, 127
    %v1864 = vpop.permute.xlu0 %1863
    %1865 = vrot.lane.b32.xlu0 %v1860, 127
    %v1866 = vpop.permute.xlu0 %1865
    %v1869 = vadd.f32 %v1775, %v1864
    %v1870 = vadd.f32 %v1776, %v1866
    %s1871 = sld [smem:[#allocation2 + $0x58]]
    %v1872 = vstv %s1871
    %v1873 = vmul.f32 %v1872, %v1813
    %v1874 = vmul.f32 %v1872, %v1814
    %1877 = vrot.lane.b32.xlu0 %v1873, 127
    %v1878 = vpop.permute.xlu0 %1877
    %1879 = vrot.lane.b32.xlu0 %v1874, 127
    %v1880 = vpop.permute.xlu0 %1879
    %v1883 = vadd.f32 %v1781, %v1878
    %v1884 = vadd.f32 %v1782, %v1880
    %s1885 = sld [smem:[#allocation2 + $0x6a]]
    %v1886 = vstv %s1885
    %v1887 = vmul.f32 %v1886, %v1813
    %v1888 = vmul.f32 %v1886, %v1814
    %1891 = vrot.lane.b32.xlu0 %v1887, 127
    %v1892 = vpop.permute.xlu0 %1891
    %1893 = vrot.lane.b32.xlu0 %v1888, 127
    %v1894 = vpop.permute.xlu0 %1893
    %v1897 = vadd.f32 %v1787, %v1892
    %v1898 = vadd.f32 %v1788, %v1894
    %s1899 = sld [smem:[#allocation2 + $0x7c]]
    %v1900 = vstv %s1899
    %v1901 = vmul.f32 %v1900, %v1813
    %v1902 = vmul.f32 %v1900, %v1814
    %1905 = vrot.lane.b32.xlu0 %v1901, 127
    %v1906 = vpop.permute.xlu0 %1905
    %1907 = vrot.lane.b32.xlu0 %v1902, 127
    %v1908 = vpop.permute.xlu0 %1907
    %v1911 = vadd.f32 %v1793, %v1906
    %v1912 = vadd.f32 %v1794, %v1908
    %s1913 = sld [smem:[#allocation2 + $0x8e]]
    %v1914 = vstv %s1913
    %v1915 = vmul.f32 %v1914, %v1813
    %v1916 = vmul.f32 %v1914, %v1814
    %1919 = vrot.lane.b32.xlu0 %v1915, 127
    %v1920 = vpop.permute.xlu0 %1919
    %1921 = vrot.lane.b32.xlu0 %v1916, 127
    %v1922 = vpop.permute.xlu0 %1921
    %v1925 = vadd.f32 %v1799, %v1920
    %v1926 = vadd.f32 %v1800, %v1922
    %s1927 = sld [smem:[#allocation2 + $0xa0]]
    %v1928 = vstv %s1927
    %v1929 = vmul.f32 %v1928, %v1813
    %v1930 = vmul.f32 %v1928, %v1814
    %1933 = vrot.lane.b32.xlu0 %v1929, 127
    %v1934 = vpop.permute.xlu0 %1933
    %1935 = vrot.lane.b32.xlu0 %v1930, 127
    %v1936 = vpop.permute.xlu0 %1935
    %v1939 = vadd.f32 %v1805, %v1934
    %v1940 = vadd.f32 %v1806, %v1936
    %s1941 = sld [smem:[#allocation2 + $0xb2]]
    %v1942 = vstv %s1941
    %v1943 = vmul.f32 %v1942, %v1813
    %v1944 = vmul.f32 %v1942, %v1814
    %1947 = vrot.lane.b32.xlu0 %v1943, 127
    %v1948 = vpop.permute.xlu0 %1947
    %1949 = vrot.lane.b32.xlu0 %v1944, 127
    %v1950 = vpop.permute.xlu0 %1949
    %v1953 = vadd.f32 %v1811, %v1948
    %v1954 = vadd.f32 %v1812, %v1950
    %s1955 = sld [smem:[#allocation2 + $0x11]]
    %v1956 = vstv %s1955
    %v1957 = vmul.f32 %v1956, %v1751
    %v1958 = vmul.f32 %v1956, %v1752
    %1961 = vrot.lane.b32.xlu0 %v1957, 125
    %v1962 = vpop.permute.xlu0 %1961
    %1963 = vrot.lane.b32.xlu0 %v1958, 125
    %v1964 = vpop.permute.xlu0 %1963
    %v1967 = vadd.f32 %v1827, %v1962
    %v1968 = vadd.f32 %v1828, %v1964
    %s1969 = sld [smem:[#allocation2 + $0x23]]
    %v1970 = vstv %s1969
    %v1971 = vmul.f32 %v1970, %v1751
    %v1972 = vmul.f32 %v1970, %v1752
    %1975 = vrot.lane.b32.xlu0 %v1971, 125
    %v1976 = vpop.permute.xlu0 %1975
    %1977 = vrot.lane.b32.xlu0 %v1972, 125
    %v1978 = vpop.permute.xlu0 %1977
    %v1981 = vadd.f32 %v1841, %v1976
    %v1982 = vadd.f32 %v1842, %v1978
    %s1983 = sld [smem:[#allocation2 + $0x35]]
    %v1984 = vstv %s1983
    %v1985 = vmul.f32 %v1984, %v1751
    %v1986 = vmul.f32 %v1984, %v1752
    %1989 = vrot.lane.b32.xlu0 %v1985, 125
    %v1990 = vpop.permute.xlu0 %1989
    %1991 = vrot.lane.b32.xlu0 %v1986, 125
    %v1992 = vpop.permute.xlu0 %1991
    %v1995 = vadd.f32 %v1855, %v1990
    %v1996 = vadd.f32 %v1856, %v1992
    %s1997 = sld [smem:[#allocation2 + $0x47]]
    %v1998 = vstv %s1997
    %v1999 = vmul.f32 %v1998, %v1751
    %v2000 = vmul.f32 %v1998, %v1752
    %2003 = vrot.lane.b32.xlu0 %v1999, 125
    %v2004 = vpop.permute.xlu0 %2003
    %2005 = vrot.lane.b32.xlu0 %v2000, 125
    %v2006 = vpop.permute.xlu0 %2005
    %v2009 = vadd.f32 %v1869, %v2004
    %v2010 = vadd.f32 %v1870, %v2006
    %s2011 = sld [smem:[#allocation2 + $0x59]]
    %v2012 = vstv %s2011
    %v2013 = vmul.f32 %v2012, %v1751
    %v2014 = vmul.f32 %v2012, %v1752
    %2017 = vrot.lane.b32.xlu0 %v2013, 125
    %v2018 = vpop.permute.xlu0 %2017
    %2019 = vrot.lane.b32.xlu0 %v2014, 125
    %v2020 = vpop.permute.xlu0 %2019
    %v2023 = vadd.f32 %v1883, %v2018
    %v2024 = vadd.f32 %v1884, %v2020
    %s2025 = sld [smem:[#allocation2 + $0x6b]]
    %v2026 = vstv %s2025
    %v2027 = vmul.f32 %v2026, %v1751
    %v2028 = vmul.f32 %v2026, %v1752
    %2031 = vrot.lane.b32.xlu0 %v2027, 125
    %v2032 = vpop.permute.xlu0 %2031
    %2033 = vrot.lane.b32.xlu0 %v2028, 125
    %v2034 = vpop.permute.xlu0 %2033
    %v2037 = vadd.f32 %v1897, %v2032
    %v2038 = vadd.f32 %v1898, %v2034
    %s2039 = sld [smem:[#allocation2 + $0x7d]]
    %v2040 = vstv %s2039
    %v2041 = vmul.f32 %v2040, %v1751
    %v2042 = vmul.f32 %v2040, %v1752
    %2045 = vrot.lane.b32.xlu0 %v2041, 125
    %v2046 = vpop.permute.xlu0 %2045
    %2047 = vrot.lane.b32.xlu0 %v2042, 125
    %v2048 = vpop.permute.xlu0 %2047
    %v2051 = vadd.f32 %v1911, %v2046
    %v2052 = vadd.f32 %v1912, %v2048
    %s2053 = sld [smem:[#allocation2 + $0x8f]]
    %v2054 = vstv %s2053
    %v2055 = vmul.f32 %v2054, %v1751
    %v2056 = vmul.f32 %v2054, %v1752
    %2059 = vrot.lane.b32.xlu0 %v2055, 125
    %v2060 = vpop.permute.xlu0 %2059
    %2061 = vrot.lane.b32.xlu0 %v2056, 125
    %v2062 = vpop.permute.xlu0 %2061
    %v2065 = vadd.f32 %v1925, %v2060
    %v2066 = vadd.f32 %v1926, %v2062
    %s2067 = sld [smem:[#allocation2 + $0xa1]]
    %v2068 = vstv %s2067
    %v2069 = vmul.f32 %v2068, %v1751
    %v2070 = vmul.f32 %v2068, %v1752
    %2073 = vrot.lane.b32.xlu0 %v2069, 125
    %v2074 = vpop.permute.xlu0 %2073
    %2075 = vrot.lane.b32.xlu0 %v2070, 125
    %v2076 = vpop.permute.xlu0 %2075
    %v2079 = vadd.f32 %v1939, %v2074
    %v2080 = vadd.f32 %v1940, %v2076
    %s2081 = sld [smem:[#allocation2 + $0xb3]]
    %v2082 = vstv %s2081
    %v2083 = vmul.f32 %v2082, %v1751
    %v2084 = vmul.f32 %v2082, %v1752
    %2087 = vrot.lane.b32.xlu0 %v2083, 125
    %v2088 = vpop.permute.xlu0 %2087
    %2089 = vrot.lane.b32.xlu0 %v2084, 125
    %v2090 = vpop.permute.xlu0 %2089
    %v2093 = vadd.f32 %v1953, %v2088
    %v2094 = vadd.f32 %v1954, %v2090
    %vm2095 = vcmask 64512
    %2096 = vst.msk [vmem:[%s2] sm:$0xff] %vm2095, %v1967
    %2097 = vst.msk [vmem:[%s2 + $0x8] sm:$0xff] %vm2095, %v1968
    %s2098 = scalar_lea.vmem %s2, 16
    %2099 = vst.msk [vmem:[%s2098] sm:$0xff] %vm2095, %v1981
    %2100 = vst.msk [vmem:[%s2098 + $0x8] sm:$0xff] %vm2095, %v1982
    %s2101 = scalar_lea.vmem %s2, 32
    %2102 = vst.msk [vmem:[%s2101] sm:$0xff] %vm2095, %v1995
    %2103 = vst.msk [vmem:[%s2101 + $0x8] sm:$0xff] %vm2095, %v1996
    %s2104 = scalar_lea.vmem %s2, 48
    %2105 = vst.msk [vmem:[%s2104] sm:$0xff] %vm2095, %v2009
    %2106 = vst.msk [vmem:[%s2104 + $0x8] sm:$0xff] %vm2095, %v2010
    %s2107 = scalar_lea.vmem %s2, 64
    %2108 = vst.msk [vmem:[%s2107] sm:$0xff] %vm2095, %v2023
    %2109 = vst.msk [vmem:[%s2107 + $0x8] sm:$0xff] %vm2095, %v2024
    %s2110 = scalar_lea.vmem %s2, 80
    %2111 = vst.msk [vmem:[%s2110] sm:$0xff] %vm2095, %v2037
    %2112 = vst.msk [vmem:[%s2110 + $0x8] sm:$0xff] %vm2095, %v2038
    %s2113 = scalar_lea.vmem %s2, 96
    %2114 = vst.msk [vmem:[%s2113] sm:$0xff] %vm2095, %v2051
    %2115 = vst.msk [vmem:[%s2113 + $0x8] sm:$0xff] %vm2095, %v2052
    %s2116 = scalar_lea.vmem %s2, 112
    %2117 = vst.msk [vmem:[%s2116] sm:$0xff] %vm2095, %v2065
    %2118 = vst.msk [vmem:[%s2116 + $0x8] sm:$0xff] %vm2095, %v2066
    %s2119 = scalar_lea.vmem %s2, 128
    %2120 = vst.msk [vmem:[%s2119] sm:$0xff] %vm2095, %v2079
    %2121 = vst.msk [vmem:[%s2119 + $0x8] sm:$0xff] %vm2095, %v2080
    %s2122 = scalar_lea.vmem %s2, 144
    %2123 = vst.msk [vmem:[%s2122] sm:$0xff] %vm2095, %v2093
    %2124 = vst.msk [vmem:[%s2122 + $0x8] sm:$0xff] %vm2095, %v2094
    // Predicated region
    $region14: #{conv2d_pallas.1} parent=1 // pred_check
      _
    $region15: #{conv2d_pallas.1} parent=1 // pred_check_branch
      %2126 = sbr.rel (0) target = $region17
    $region16: #{conv2d_pallas.1} parent=1 // pred_region
      _
    $region17: #{conv2d_pallas.1} parent=1 // pred_fallthru
      _
    // Predicated region
    $region18: #{conv2d_pallas.1} parent=1 // pred_check
      _
    $region19: #{conv2d_pallas.1} parent=1 // pred_check_branch
      %2128 = sbr.rel (0) target = $region21
    $region20: #{conv2d_pallas.1} parent=1 // pred_region
      _
    $region21: #{conv2d_pallas.1} parent=1 // pred_fallthru
      _
    %2129 = vsyncpa [#allocation3], 1

</llo_original>
